<compile_context>
chip_gen: v7x
topology: tpu7x:2x2x1
jax: 0.10.0
libtpu: 0.0.40
codegen_flags: <defaults>
</compile_context>

<pallas_src>
import math
import functools
import numpy as np

import jax
import jax.numpy as jnp
from jax.experimental import pallas as pl
from jax.experimental.pallas import tpu as pltpu  # noqa: F401  (TPU backend)

LN_EPS = 1e-5


def get_1d_sincos_pos_embed_from_grid(embed_dim, length):
    pos = np.arange(length)
    assert embed_dim % 2 == 0
    omega = np.arange(embed_dim // 2, dtype=np.float32)
    omega /= embed_dim / 2.0
    omega = 1.0 / 10000 ** omega
    out = np.einsum('m,d->md', pos, omega)
    emb = np.concatenate([np.sin(out), np.cos(out)], axis=1).astype(np.float32)
    # torch casts the table to bfloat16 before adding to a float32 q;
    # replicate the precision loss, then promote back to float32.
    return jnp.asarray(emb).astype(jnp.bfloat16).astype(jnp.float32)


# ---------------------------------------------------------------------------
# Single fused kernel: kv_proj + ln_kv + ln_q(+pos) + MHA (in-proj, softmax,
# out-proj). Whole batch in one invocation; everything stays in VMEM.
# ---------------------------------------------------------------------------
def _projector_kernel(x_ref,                     # (B*S, E)
                      w_kv_ref,                  # (E, D)   kv_proj (no bias)
                      lnkv_g_ref, lnkv_b_ref,    # (1, D)
                      query_ref, pos_ref,        # (Q, D), (Q, D)
                      lnq_g_ref, lnq_b_ref,      # (1, D)
                      wq_ref, bq_ref,            # (D, D), (1, D)  (pre-scaled by 1/sqrt(dh))
                      w_in_kv_ref, b_in_kv_ref,  # (D, 2D), (1, 2D) packed [K | V]
                      wo_ref, bo_ref,            # (D, D), (1, D)
                      o_ref,                     # (B*Q, D) output (also used as ctx buffer)
                      *, batch, seq, num_heads, dim_head, eps):
    D = num_heads * dim_head
    nq = query_ref.shape[0]

    # ---- kv = ln_kv(kv_proj(x)) — all batch rows in one MXU push -------------
    h = jnp.dot(x_ref[...], w_kv_ref[...], preferred_element_type=jnp.float32)   # (B*S, D)
    mu = jnp.mean(h, axis=-1, keepdims=True)
    var = jnp.mean(jnp.square(h - mu), axis=-1, keepdims=True)
    kv = (h - mu) * jax.lax.rsqrt(var + eps) * lnkv_g_ref[...] + lnkv_b_ref[...]

    # ---- q = ln_q(query) + pos, projected (batch-invariant, computed once) ---
    q0 = query_ref[...]                                                           # (Q, D)
    qmu = jnp.mean(q0, axis=-1, keepdims=True)
    qvar = jnp.mean(jnp.square(q0 - qmu), axis=-1, keepdims=True)
    q = (q0 - qmu) * jax.lax.rsqrt(qvar + eps) * lnq_g_ref[...] + lnq_b_ref[...]
    q = q + pos_ref[...]
    # 1/sqrt(dim_head) already folded into wq/bq in the wrapper.
    qp = jnp.dot(q, wq_ref[...], preferred_element_type=jnp.float32) + bq_ref[...]  # (Q, D)

    # ---- packed K/V in-projection: one (B*S, D) @ (D, 2D) matmul -------------
    kvp = (jnp.dot(kv, w_in_kv_ref[...], preferred_element_type=jnp.float32)
           + b_in_kv_ref[...])                                                    # (B*S, 2D)

    # ---- per-head attention (static loops, all-2D ops, no transposes) --------
    for hd in range(num_heads):
        lo = hd * dim_head
        qh = qp[:, lo:lo + dim_head]                                              # (Q, dh)
        kh = kvp[:, lo:lo + dim_head]                                             # (B*S, dh)
        # scores against all batches at once; contract on last dims (no .T)
        s_all = jax.lax.dot_general(qh, kh, (((1,), (1,)), ((), ())),
                                    preferred_element_type=jnp.float32)           # (Q, B*S)
        for b in range(batch):
            s = s_all[:, b * seq:(b + 1) * seq]                                    # (Q, S)
            s = s - jnp.max(s, axis=-1, keepdims=True)
            p = jnp.exp(s)
            p = p * pl.reciprocal(jnp.sum(p, axis=-1, keepdims=True), approx=True)
            vh = kvp[b * seq:(b + 1) * seq, D + lo:D + lo + dim_head]              # (S, dh)
            # write this head's context straight into its lane slice (no concat)
            o_ref[b * nq:(b + 1) * nq, lo:lo + dim_head] = jnp.dot(
                p, vh, preferred_element_type=jnp.float32)

    # ---- out_proj: one (B*Q, D) @ (D, D) matmul -------------------------------
    ctx = o_ref[...]
    o_ref[...] = (jnp.dot(ctx, wo_ref[...], preferred_element_type=jnp.float32)
                  + bo_ref[...])


# ---------------------------------------------------------------------------
# Wrapper
# ---------------------------------------------------------------------------
def projector_forward(x, params, *, num_queries, dim_head):
    B, S, E = x.shape
    D = params['w_kv'].shape[1]
    num_heads = D // dim_head
    Q = num_queries
    scale = 1.0 / math.sqrt(dim_head)

    pos = get_1d_sincos_pos_embed_from_grid(D, Q)                 # (Q, D) f32

    # wrapper-side packing / reshapes (all tiny, outside the kernel)
    x2 = x.reshape(B * S, E)
    wq_s = params['wq'] * scale
    bq_s = (params['bq'] * scale).reshape(1, D)
    w_in_kv = jnp.concatenate([params['wk'], params['wv']], axis=1)        # (D, 2D)
    b_in_kv = jnp.concatenate([params['bk'], params['bv']]).reshape(1, 2 * D)

    kernel = functools.partial(_projector_kernel, batch=B, seq=S,
                               num_heads=num_heads, dim_head=dim_head, eps=LN_EPS)

    out2 = pl.pallas_call(
        kernel,
        out_shape=jax.ShapeDtypeStruct((B * Q, D), jnp.float32),
    )(x2, params['w_kv'],
      params['lnkv_g'].reshape(1, D), params['lnkv_b'].reshape(1, D),
      params['query'], pos,
      params['lnq_g'].reshape(1, D), params['lnq_b'].reshape(1, D),
      wq_s, bq_s, w_in_kv, b_in_kv,
      params['wo'], params['bo'].reshape(1, D))

    # self.mlp is Identity for mlp_type='identity'
    return out2.reshape(B, Q, D)


# ---------------------------------------------------------------------------
# Pure-JAX reference for validation
# ---------------------------------------------------------------------------
def _reference(x, params, pos, num_heads, dim_head):
    def ln(t, g, b):
        m = t.mean(-1, keepdims=True)
        v = jnp.square(t - m).mean(-1, keepdims=True)
        return (t - m) / jnp.sqrt(v + LN_EPS) * g + b

    kv = ln(x @ params['w_kv'], params['lnkv_g'], params['lnkv_b'])
    q = ln(params['query'], params['lnq_g'], params['lnq_b']) + pos
    q = jnp.broadcast_to(q[None], (x.shape[0],) + q.shape)

    qp = q @ params['wq'] + params['bq']
    kp = kv @ params['wk'] + params['bk']
    vp = kv @ params['wv'] + params['bv']
    B, Q, D = qp.shape
    S = kp.shape[1]
    qh = qp.reshape(B, Q, num_heads, dim_head).transpose(0, 2, 1, 3)
    kh = kp.reshape(B, S, num_heads, dim_head).transpose(0, 2, 1, 3)
    vh = vp.reshape(B, S, num_heads, dim_head).transpose(0, 2, 1, 3)
    s = jnp.einsum('bhqd,bhkd->bhqk', qh, kh) / math.sqrt(dim_head)
    p = jax.nn.softmax(s, axis=-1)
    ctx = jnp.einsum('bhqk,bhkd->bhqd', p, vh).transpose(0, 2, 1, 3).reshape(B, Q, D)
    return ctx @ params['wo'] + params['bo']


if __name__ == "__main__":
    # Small, module-consistent shapes
    B, S = 2, 16                      # batch, encoder sequence length
    E, D = 64, 32                     # encoder_hidden_size, decoder_hidden_size
    dim_head, Q = 8, 8                # head dim, num_queries  (num_heads = 4)

    key = jax.random.PRNGKey(0)
    ks = jax.random.split(key, 7)
    params = dict(
        # trunc_normal(std=0.02)-style deterministic init (scaled normals)
        query=jax.random.normal(ks[0], (Q, D), jnp.float32) * 0.02,
        w_kv=jax.random.normal(ks[1], (E, D), jnp.float32) * 0.02,   # kv_proj (no bias)
        lnkv_g=jnp.ones((D,), jnp.float32), lnkv_b=jnp.zeros((D,), jnp.float32),
        lnq_g=jnp.ones((D,), jnp.float32), lnq_b=jnp.zeros((D,), jnp.float32),
        wq=jax.random.normal(ks[2], (D, D), jnp.float32) * 0.02,
        wk=jax.random.normal(ks[3], (D, D), jnp.float32) * 0.02,
        wv=jax.random.normal(ks[4], (D, D), jnp.float32) * 0.02,
        bq=jnp.zeros((D,), jnp.float32),   # MHA in_proj_bias defaults to zeros
        bk=jnp.zeros((D,), jnp.float32),
        bv=jnp.zeros((D,), jnp.float32),
        wo=jax.random.normal(ks[5], (D, D), jnp.float32) * 0.02,
        bo=jnp.zeros((D,), jnp.float32),   # out_proj bias init to 0 by _init_weights
    )
    x = jax.random.normal(ks[6], (B, S, E), jnp.float32)

    out = projector_forward(x, params, num_queries=Q, dim_head=dim_head)
    out = jax.block_until_ready(out)
    assert out.shape == (B, Q, D), out.shape

    pos = get_1d_sincos_pos_embed_from_grid(D, Q)
    ref = _reference(x, params, pos, D // dim_head, dim_head)
    max_err = float(jnp.max(jnp.abs(out - ref)))
    assert jnp.allclose(out, ref, rtol=1e-3, atol=1e-3), max_err

    print("KERNEL_OK")
</pallas_src>

<mosaic_0001>
module attributes {stable_mosaic.version = 11 : i64} {
  func.func @_projector_kernel(%arg0: memref<32x64xf32, #tpu.memory_space<vmem>>, %arg1: memref<64x32xf32, #tpu.memory_space<vmem>>, %arg2: memref<1x32xf32, #tpu.memory_space<vmem>>, %arg3: memref<1x32xf32, #tpu.memory_space<vmem>>, %arg4: memref<8x32xf32, #tpu.memory_space<vmem>>, %arg5: memref<8x32xf32, #tpu.memory_space<vmem>>, %arg6: memref<1x32xf32, #tpu.memory_space<vmem>>, %arg7: memref<1x32xf32, #tpu.memory_space<vmem>>, %arg8: memref<32x32xf32, #tpu.memory_space<vmem>>, %arg9: memref<1x32xf32, #tpu.memory_space<vmem>>, %arg10: memref<32x64xf32, #tpu.memory_space<vmem>>, %arg11: memref<1x64xf32, #tpu.memory_space<vmem>>, %arg12: memref<32x32xf32, #tpu.memory_space<vmem>>, %arg13: memref<1x32xf32, #tpu.memory_space<vmem>>, %arg14: memref<16x32xf32, #tpu.memory_space<vmem>>) attributes {dimension_semantics = [], scalar_prefetch = 0 : i64, scratch_operands = 0 : i64, tpu.core_type = #tpu.core_type<tc>} {
    %c0 = arith.constant 0 : index
    %c0_0 = arith.constant 0 : index
    %0 = vector.load %arg0[%c0, %c0_0] : memref<32x64xf32, #tpu.memory_space<vmem>>, vector<32x64xf32>
    %c0_1 = arith.constant 0 : index
    %c0_2 = arith.constant 0 : index
    %1 = vector.load %arg1[%c0_1, %c0_2] : memref<64x32xf32, #tpu.memory_space<vmem>>, vector<64x32xf32>
    %cst = arith.constant dense<0.000000e+00> : vector<32x32xf32>
    %2 = tpu.matmul %0, %1, %cst {dimension_numbers = #tpu.dot_dimension_numbers<[1], [0], [0], [1], [0, 0, 1, 1], [], []>} : vector<32x64xf32>, vector<64x32xf32>, vector<32x32xf32> -> vector<32x32xf32>
    %cst_3 = arith.constant dense<0.000000e+00> : vector<32xf32>
    %3 = vector.multi_reduction <add>, %2, %cst_3 [1] : vector<32x32xf32> to vector<32xf32>
    %4 = vector.shape_cast %3 : vector<32xf32> to vector<32x1xf32>
    %cst_4 = arith.constant 3.200000e+01 : f32
    %5 = vector.broadcast %cst_4 : f32 to vector<32x1xf32>
    %6 = arith.divf %4, %5 : vector<32x1xf32>
    %7 = vector.broadcast %6 : vector<32x1xf32> to vector<32x32xf32>
    %8 = arith.subf %2, %7 : vector<32x32xf32>
    %9 = arith.mulf %8, %8 : vector<32x32xf32>
    %cst_5 = arith.constant dense<0.000000e+00> : vector<32xf32>
    %10 = vector.multi_reduction <add>, %9, %cst_5 [1] : vector<32x32xf32> to vector<32xf32>
    %11 = vector.shape_cast %10 : vector<32xf32> to vector<32x1xf32>
    %cst_6 = arith.constant 3.200000e+01 : f32
    %12 = vector.broadcast %cst_6 : f32 to vector<32x1xf32>
    %13 = arith.divf %11, %12 : vector<32x1xf32>
    %14 = vector.broadcast %6 : vector<32x1xf32> to vector<32x32xf32>
    %15 = arith.subf %2, %14 : vector<32x32xf32>
    %cst_7 = arith.constant 9.99999974E-6 : f32
    %16 = vector.broadcast %cst_7 : f32 to vector<32x1xf32>
    %17 = arith.addf %13, %16 : vector<32x1xf32>
    %18 = math.rsqrt %17 : vector<32x1xf32>
    %19 = vector.broadcast %18 : vector<32x1xf32> to vector<32x32xf32>
    %20 = arith.mulf %15, %19 : vector<32x32xf32>
    %c0_8 = arith.constant 0 : index
    %c0_9 = arith.constant 0 : index
    %21 = vector.load %arg2[%c0_8, %c0_9] : memref<1x32xf32, #tpu.memory_space<vmem>>, vector<1x32xf32>
    %22 = vector.broadcast %21 : vector<1x32xf32> to vector<32x32xf32>
    %23 = arith.mulf %20, %22 : vector<32x32xf32>
    %c0_10 = arith.constant 0 : index
    %c0_11 = arith.constant 0 : index
    %24 = vector.load %arg3[%c0_10, %c0_11] : memref<1x32xf32, #tpu.memory_space<vmem>>, vector<1x32xf32>
    %25 = vector.broadcast %24 : vector<1x32xf32> to vector<32x32xf32>
    %26 = arith.addf %23, %25 : vector<32x32xf32>
    %c0_12 = arith.constant 0 : index
    %c0_13 = arith.constant 0 : index
    %27 = vector.load %arg4[%c0_12, %c0_13] : memref<8x32xf32, #tpu.memory_space<vmem>>, vector<8x32xf32>
    %cst_14 = arith.constant dense<0.000000e+00> : vector<8xf32>
    %28 = vector.multi_reduction <add>, %27, %cst_14 [1] : vector<8x32xf32> to vector<8xf32>
    %29 = vector.shape_cast %28 : vector<8xf32> to vector<8x1xf32>
    %cst_15 = arith.constant 3.200000e+01 : f32
    %30 = vector.broadcast %cst_15 : f32 to vector<8x1xf32>
    %31 = arith.divf %29, %30 : vector<8x1xf32>
    %32 = vector.broadcast %31 : vector<8x1xf32> to vector<8x32xf32>
    %33 = arith.subf %27, %32 : vector<8x32xf32>
    %34 = arith.mulf %33, %33 : vector<8x32xf32>
    %cst_16 = arith.constant dense<0.000000e+00> : vector<8xf32>
    %35 = vector.multi_reduction <add>, %34, %cst_16 [1] : vector<8x32xf32> to vector<8xf32>
    %36 = vector.shape_cast %35 : vector<8xf32> to vector<8x1xf32>
    %cst_17 = arith.constant 3.200000e+01 : f32
    %37 = vector.broadcast %cst_17 : f32 to vector<8x1xf32>
    %38 = arith.divf %36, %37 : vector<8x1xf32>
    %39 = vector.broadcast %31 : vector<8x1xf32> to vector<8x32xf32>
    %40 = arith.subf %27, %39 : vector<8x32xf32>
    %cst_18 = arith.constant 9.99999974E-6 : f32
    %41 = vector.broadcast %cst_18 : f32 to vector<8x1xf32>
    %42 = arith.addf %38, %41 : vector<8x1xf32>
    %43 = math.rsqrt %42 : vector<8x1xf32>
    %44 = vector.broadcast %43 : vector<8x1xf32> to vector<8x32xf32>
    %45 = arith.mulf %40, %44 : vector<8x32xf32>
    %c0_19 = arith.constant 0 : index
    %c0_20 = arith.constant 0 : index
    %46 = vector.load %arg6[%c0_19, %c0_20] : memref<1x32xf32, #tpu.memory_space<vmem>>, vector<1x32xf32>
    %47 = vector.broadcast %46 : vector<1x32xf32> to vector<8x32xf32>
    %48 = arith.mulf %45, %47 : vector<8x32xf32>
    %c0_21 = arith.constant 0 : index
    %c0_22 = arith.constant 0 : index
    %49 = vector.load %arg7[%c0_21, %c0_22] : memref<1x32xf32, #tpu.memory_space<vmem>>, vector<1x32xf32>
    %50 = vector.broadcast %49 : vector<1x32xf32> to vector<8x32xf32>
    %51 = arith.addf %48, %50 : vector<8x32xf32>
    %c0_23 = arith.constant 0 : index
    %c0_24 = arith.constant 0 : index
    %52 = vector.load %arg5[%c0_23, %c0_24] : memref<8x32xf32, #tpu.memory_space<vmem>>, vector<8x32xf32>
    %53 = arith.addf %51, %52 : vector<8x32xf32>
    %c0_25 = arith.constant 0 : index
    %c0_26 = arith.constant 0 : index
    %54 = vector.load %arg8[%c0_25, %c0_26] : memref<32x32xf32, #tpu.memory_space<vmem>>, vector<32x32xf32>
    %cst_27 = arith.constant dense<0.000000e+00> : vector<8x32xf32>
    %55 = tpu.matmul %53, %54, %cst_27 {dimension_numbers = #tpu.dot_dimension_numbers<[1], [0], [0], [1], [0, 0, 1, 1], [], []>} : vector<8x32xf32>, vector<32x32xf32>, vector<8x32xf32> -> vector<8x32xf32>
    %c0_28 = arith.constant 0 : index
    %c0_29 = arith.constant 0 : index
    %56 = vector.load %arg9[%c0_28, %c0_29] : memref<1x32xf32, #tpu.memory_space<vmem>>, vector<1x32xf32>
    %57 = vector.broadcast %56 : vector<1x32xf32> to vector<8x32xf32>
    %58 = arith.addf %55, %57 : vector<8x32xf32>
    %c0_30 = arith.constant 0 : index
    %c0_31 = arith.constant 0 : index
    %59 = vector.load %arg10[%c0_30, %c0_31] : memref<32x64xf32, #tpu.memory_space<vmem>>, vector<32x64xf32>
    %cst_32 = arith.constant dense<0.000000e+00> : vector<32x64xf32>
    %60 = tpu.matmul %26, %59, %cst_32 {dimension_numbers = #tpu.dot_dimension_numbers<[1], [0], [0], [1], [0, 0, 1, 1], [], []>} : vector<32x32xf32>, vector<32x64xf32>, vector<32x64xf32> -> vector<32x64xf32>
    %c0_33 = arith.constant 0 : index
    %c0_34 = arith.constant 0 : index
    %61 = vector.load %arg11[%c0_33, %c0_34] : memref<1x64xf32, #tpu.memory_space<vmem>>, vector<1x64xf32>
    %62 = vector.broadcast %61 : vector<1x64xf32> to vector<32x64xf32>
    %63 = arith.addf %60, %62 : vector<32x64xf32>
    %64 = vector.extract_strided_slice %58 {offsets = [0, 0], sizes = [8, 8], strides = [1, 1]} : vector<8x32xf32> to vector<8x8xf32>
    %65 = vector.extract_strided_slice %63 {offsets = [0, 0], sizes = [32, 8], strides = [1, 1]} : vector<32x64xf32> to vector<32x8xf32>
    %cst_35 = arith.constant dense<0.000000e+00> : vector<8x32xf32>
    %66 = tpu.matmul %64, %65, %cst_35 {dimension_numbers = #tpu.dot_dimension_numbers<[1], [1], [0], [0], [0, 0, 1, 0], [], []>} : vector<8x8xf32>, vector<32x8xf32>, vector<8x32xf32> -> vector<8x32xf32>
    %67 = vector.extract_strided_slice %66 {offsets = [0, 0], sizes = [8, 16], strides = [1, 1]} : vector<8x32xf32> to vector<8x16xf32>
    %cst_36 = arith.constant dense<0xFF800000> : vector<8xf32>
    %68 = vector.multi_reduction <maximumf>, %67, %cst_36 [1] : vector<8x16xf32> to vector<8xf32>
    %69 = vector.shape_cast %68 : vector<8xf32> to vector<8x1xf32>
    %70 = vector.broadcast %69 : vector<8x1xf32> to vector<8x16xf32>
    %71 = arith.subf %67, %70 : vector<8x16xf32>
    %72 = math.exp %71 : vector<8x16xf32>
    %cst_37 = arith.constant dense<0.000000e+00> : vector<8xf32>
    %73 = vector.multi_reduction <add>, %72, %cst_37 [1] : vector<8x16xf32> to vector<8xf32>
    %74 = vector.shape_cast %73 : vector<8xf32> to vector<8x1xf32>
    %75 = tpu.reciprocal %74 {approx = true} : vector<8x1xf32> -> vector<8x1xf32>
    %76 = vector.broadcast %75 : vector<8x1xf32> to vector<8x16xf32>
    %77 = arith.mulf %72, %76 : vector<8x16xf32>
    %78 = vector.extract_strided_slice %63 {offsets = [0, 32], sizes = [16, 8], strides = [1, 1]} : vector<32x64xf32> to vector<16x8xf32>
    %cst_38 = arith.constant dense<0.000000e+00> : vector<8x8xf32>
    %79 = tpu.matmul %77, %78, %cst_38 {dimension_numbers = #tpu.dot_dimension_numbers<[1], [0], [0], [1], [0, 0, 1, 1], [], []>} : vector<8x16xf32>, vector<16x8xf32>, vector<8x8xf32> -> vector<8x8xf32>
    %c0_39 = arith.constant 0 : index
    %c0_40 = arith.constant 0 : index
    %80 = vector.load %arg14[%c0_39, %c0_40] : memref<16x32xf32, #tpu.memory_space<vmem>>, vector<8x8xf32>
    tpu.vector_store %arg14[%c0_39, %c0_40], %79 {strides = array<i32>} : memref<16x32xf32, #tpu.memory_space<vmem>>, vector<8x8xf32>,
    %81 = vector.extract_strided_slice %66 {offsets = [0, 16], sizes = [8, 16], strides = [1, 1]} : vector<8x32xf32> to vector<8x16xf32>
    %cst_41 = arith.constant dense<0xFF800000> : vector<8xf32>
    %82 = vector.multi_reduction <maximumf>, %81, %cst_41 [1] : vector<8x16xf32> to vector<8xf32>
    %83 = vector.shape_cast %82 : vector<8xf32> to vector<8x1xf32>
    %84 = vector.broadcast %83 : vector<8x1xf32> to vector<8x16xf32>
    %85 = arith.subf %81, %84 : vector<8x16xf32>
    %86 = math.exp %85 : vector<8x16xf32>
    %cst_42 = arith.constant dense<0.000000e+00> : vector<8xf32>
    %87 = vector.multi_reduction <add>, %86, %cst_42 [1] : vector<8x16xf32> to vector<8xf32>
    %88 = vector.shape_cast %87 : vector<8xf32> to vector<8x1xf32>
    %89 = tpu.reciprocal %88 {approx = true} : vector<8x1xf32> -> vector<8x1xf32>
    %90 = vector.broadcast %89 : vector<8x1xf32> to vector<8x16xf32>
    %91 = arith.mulf %86, %90 : vector<8x16xf32>
    %92 = vector.extract_strided_slice %63 {offsets = [16, 32], sizes = [16, 8], strides = [1, 1]} : vector<32x64xf32> to vector<16x8xf32>
    %cst_43 = arith.constant dense<0.000000e+00> : vector<8x8xf32>
    %93 = tpu.matmul %91, %92, %cst_43 {dimension_numbers = #tpu.dot_dimension_numbers<[1], [0], [0], [1], [0, 0, 1, 1], [], []>} : vector<8x16xf32>, vector<16x8xf32>, vector<8x8xf32> -> vector<8x8xf32>
    %c8 = arith.constant 8 : index
    %c0_44 = arith.constant 0 : index
    %94 = vector.load %arg14[%c8, %c0_44] : memref<16x32xf32, #tpu.memory_space<vmem>>, vector<8x8xf32>
    tpu.vector_store %arg14[%c8, %c0_44], %93 {strides = array<i32>} : memref<16x32xf32, #tpu.memory_space<vmem>>, vector<8x8xf32>,
    %95 = vector.extract_strided_slice %58 {offsets = [0, 8], sizes = [8, 8], strides = [1, 1]} : vector<8x32xf32> to vector<8x8xf32>
    %96 = vector.extract_strided_slice %63 {offsets = [0, 8], sizes = [32, 8], strides = [1, 1]} : vector<32x64xf32> to vector<32x8xf32>
    %cst_45 = arith.constant dense<0.000000e+00> : vector<8x32xf32>
    %97 = tpu.matmul %95, %96, %cst_45 {dimension_numbers = #tpu.dot_dimension_numbers<[1], [1], [0], [0], [0, 0, 1, 0], [], []>} : vector<8x8xf32>, vector<32x8xf32>, vector<8x32xf32> -> vector<8x32xf32>
    %98 = vector.extract_strided_slice %97 {offsets = [0, 0], sizes = [8, 16], strides = [1, 1]} : vector<8x32xf32> to vector<8x16xf32>
    %cst_46 = arith.constant dense<0xFF800000> : vector<8xf32>
    %99 = vector.multi_reduction <maximumf>, %98, %cst_46 [1] : vector<8x16xf32> to vector<8xf32>
    %100 = vector.shape_cast %99 : vector<8xf32> to vector<8x1xf32>
    %101 = vector.broadcast %100 : vector<8x1xf32> to vector<8x16xf32>
    %102 = arith.subf %98, %101 : vector<8x16xf32>
    %103 = math.exp %102 : vector<8x16xf32>
    %cst_47 = arith.constant dense<0.000000e+00> : vector<8xf32>
    %104 = vector.multi_reduction <add>, %103, %cst_47 [1] : vector<8x16xf32> to vector<8xf32>
    %105 = vector.shape_cast %104 : vector<8xf32> to vector<8x1xf32>
    %106 = tpu.reciprocal %105 {approx = true} : vector<8x1xf32> -> vector<8x1xf32>
    %107 = vector.broadcast %106 : vector<8x1xf32> to vector<8x16xf32>
    %108 = arith.mulf %103, %107 : vector<8x16xf32>
    %109 = vector.extract_strided_slice %63 {offsets = [0, 40], sizes = [16, 8], strides = [1, 1]} : vector<32x64xf32> to vector<16x8xf32>
    %cst_48 = arith.constant dense<0.000000e+00> : vector<8x8xf32>
    %110 = tpu.matmul %108, %109, %cst_48 {dimension_numbers = #tpu.dot_dimension_numbers<[1], [0], [0], [1], [0, 0, 1, 1], [], []>} : vector<8x16xf32>, vector<16x8xf32>, vector<8x8xf32> -> vector<8x8xf32>
    %c0_49 = arith.constant 0 : index
    %c8_50 = arith.constant 8 : index
    %111 = vector.load %arg14[%c0_49, %c8_50] : memref<16x32xf32, #tpu.memory_space<vmem>>, vector<8x8xf32>
    tpu.vector_store %arg14[%c0_49, %c8_50], %110 {strides = array<i32>} : memref<16x32xf32, #tpu.memory_space<vmem>>, vector<8x8xf32>,
    %112 = vector.extract_strided_slice %97 {offsets = [0, 16], sizes = [8, 16], strides = [1, 1]} : vector<8x32xf32> to vector<8x16xf32>
    %cst_51 = arith.constant dense<0xFF800000> : vector<8xf32>
    %113 = vector.multi_reduction <maximumf>, %112, %cst_51 [1] : vector<8x16xf32> to vector<8xf32>
    %114 = vector.shape_cast %113 : vector<8xf32> to vector<8x1xf32>
    %115 = vector.broadcast %114 : vector<8x1xf32> to vector<8x16xf32>
    %116 = arith.subf %112, %115 : vector<8x16xf32>
    %117 = math.exp %116 : vector<8x16xf32>
    %cst_52 = arith.constant dense<0.000000e+00> : vector<8xf32>
    %118 = vector.multi_reduction <add>, %117, %cst_52 [1] : vector<8x16xf32> to vector<8xf32>
    %119 = vector.shape_cast %118 : vector<8xf32> to vector<8x1xf32>
    %120 = tpu.reciprocal %119 {approx = true} : vector<8x1xf32> -> vector<8x1xf32>
    %121 = vector.broadcast %120 : vector<8x1xf32> to vector<8x16xf32>
    %122 = arith.mulf %117, %121 : vector<8x16xf32>
    %123 = vector.extract_strided_slice %63 {offsets = [16, 40], sizes = [16, 8], strides = [1, 1]} : vector<32x64xf32> to vector<16x8xf32>
    %cst_53 = arith.constant dense<0.000000e+00> : vector<8x8xf32>
    %124 = tpu.matmul %122, %123, %cst_53 {dimension_numbers = #tpu.dot_dimension_numbers<[1], [0], [0], [1], [0, 0, 1, 1], [], []>} : vector<8x16xf32>, vector<16x8xf32>, vector<8x8xf32> -> vector<8x8xf32>
    %c8_54 = arith.constant 8 : index
    %c8_55 = arith.constant 8 : index
    %125 = vector.load %arg14[%c8_54, %c8_55] : memref<16x32xf32, #tpu.memory_space<vmem>>, vector<8x8xf32>
    tpu.vector_store %arg14[%c8_54, %c8_55], %124 {strides = array<i32>} : memref<16x32xf32, #tpu.memory_space<vmem>>, vector<8x8xf32>,
    %126 = vector.extract_strided_slice %58 {offsets = [0, 16], sizes = [8, 8], strides = [1, 1]} : vector<8x32xf32> to vector<8x8xf32>
    %127 = vector.extract_strided_slice %63 {offsets = [0, 16], sizes = [32, 8], strides = [1, 1]} : vector<32x64xf32> to vector<32x8xf32>
    %cst_56 = arith.constant dense<0.000000e+00> : vector<8x32xf32>
    %128 = tpu.matmul %126, %127, %cst_56 {dimension_numbers = #tpu.dot_dimension_numbers<[1], [1], [0], [0], [0, 0, 1, 0], [], []>} : vector<8x8xf32>, vector<32x8xf32>, vector<8x32xf32> -> vector<8x32xf32>
    %129 = vector.extract_strided_slice %128 {offsets = [0, 0], sizes = [8, 16], strides = [1, 1]} : vector<8x32xf32> to vector<8x16xf32>
    %cst_57 = arith.constant dense<0xFF800000> : vector<8xf32>
    %130 = vector.multi_reduction <maximumf>, %129, %cst_57 [1] : vector<8x16xf32> to vector<8xf32>
    %131 = vector.shape_cast %130 : vector<8xf32> to vector<8x1xf32>
    %132 = vector.broadcast %131 : vector<8x1xf32> to vector<8x16xf32>
    %133 = arith.subf %129, %132 : vector<8x16xf32>
    %134 = math.exp %133 : vector<8x16xf32>
    %cst_58 = arith.constant dense<0.000000e+00> : vector<8xf32>
    %135 = vector.multi_reduction <add>, %134, %cst_58 [1] : vector<8x16xf32> to vector<8xf32>
    %136 = vector.shape_cast %135 : vector<8xf32> to vector<8x1xf32>
    %137 = tpu.reciprocal %136 {approx = true} : vector<8x1xf32> -> vector<8x1xf32>
    %138 = vector.broadcast %137 : vector<8x1xf32> to vector<8x16xf32>
    %139 = arith.mulf %134, %138 : vector<8x16xf32>
    %140 = vector.extract_strided_slice %63 {offsets = [0, 48], sizes = [16, 8], strides = [1, 1]} : vector<32x64xf32> to vector<16x8xf32>
    %cst_59 = arith.constant dense<0.000000e+00> : vector<8x8xf32>
    %141 = tpu.matmul %139, %140, %cst_59 {dimension_numbers = #tpu.dot_dimension_numbers<[1], [0], [0], [1], [0, 0, 1, 1], [], []>} : vector<8x16xf32>, vector<16x8xf32>, vector<8x8xf32> -> vector<8x8xf32>
    %c0_60 = arith.constant 0 : index
    %c16 = arith.constant 16 : index
    %142 = vector.load %arg14[%c0_60, %c16] : memref<16x32xf32, #tpu.memory_space<vmem>>, vector<8x8xf32>
    tpu.vector_store %arg14[%c0_60, %c16], %141 {strides = array<i32>} : memref<16x32xf32, #tpu.memory_space<vmem>>, vector<8x8xf32>,
    %143 = vector.extract_strided_slice %128 {offsets = [0, 16], sizes = [8, 16], strides = [1, 1]} : vector<8x32xf32> to vector<8x16xf32>
    %cst_61 = arith.constant dense<0xFF800000> : vector<8xf32>
    %144 = vector.multi_reduction <maximumf>, %143, %cst_61 [1] : vector<8x16xf32> to vector<8xf32>
    %145 = vector.shape_cast %144 : vector<8xf32> to vector<8x1xf32>
    %146 = vector.broadcast %145 : vector<8x1xf32> to vector<8x16xf32>
    %147 = arith.subf %143, %146 : vector<8x16xf32>
    %148 = math.exp %147 : vector<8x16xf32>
    %cst_62 = arith.constant dense<0.000000e+00> : vector<8xf32>
    %149 = vector.multi_reduction <add>, %148, %cst_62 [1] : vector<8x16xf32> to vector<8xf32>
    %150 = vector.shape_cast %149 : vector<8xf32> to vector<8x1xf32>
    %151 = tpu.reciprocal %150 {approx = true} : vector<8x1xf32> -> vector<8x1xf32>
    %152 = vector.broadcast %151 : vector<8x1xf32> to vector<8x16xf32>
    %153 = arith.mulf %148, %152 : vector<8x16xf32>
    %154 = vector.extract_strided_slice %63 {offsets = [16, 48], sizes = [16, 8], strides = [1, 1]} : vector<32x64xf32> to vector<16x8xf32>
    %cst_63 = arith.constant dense<0.000000e+00> : vector<8x8xf32>
    %155 = tpu.matmul %153, %154, %cst_63 {dimension_numbers = #tpu.dot_dimension_numbers<[1], [0], [0], [1], [0, 0, 1, 1], [], []>} : vector<8x16xf32>, vector<16x8xf32>, vector<8x8xf32> -> vector<8x8xf32>
    %c8_64 = arith.constant 8 : index
    %c16_65 = arith.constant 16 : index
    %156 = vector.load %arg14[%c8_64, %c16_65] : memref<16x32xf32, #tpu.memory_space<vmem>>, vector<8x8xf32>
    tpu.vector_store %arg14[%c8_64, %c16_65], %155 {strides = array<i32>} : memref<16x32xf32, #tpu.memory_space<vmem>>, vector<8x8xf32>,
    %157 = vector.extract_strided_slice %58 {offsets = [0, 24], sizes = [8, 8], strides = [1, 1]} : vector<8x32xf32> to vector<8x8xf32>
    %158 = vector.extract_strided_slice %63 {offsets = [0, 24], sizes = [32, 8], strides = [1, 1]} : vector<32x64xf32> to vector<32x8xf32>
    %cst_66 = arith.constant dense<0.000000e+00> : vector<8x32xf32>
    %159 = tpu.matmul %157, %158, %cst_66 {dimension_numbers = #tpu.dot_dimension_numbers<[1], [1], [0], [0], [0, 0, 1, 0], [], []>} : vector<8x8xf32>, vector<32x8xf32>, vector<8x32xf32> -> vector<8x32xf32>
    %160 = vector.extract_strided_slice %159 {offsets = [0, 0], sizes = [8, 16], strides = [1, 1]} : vector<8x32xf32> to vector<8x16xf32>
    %cst_67 = arith.constant dense<0xFF800000> : vector<8xf32>
    %161 = vector.multi_reduction <maximumf>, %160, %cst_67 [1] : vector<8x16xf32> to vector<8xf32>
    %162 = vector.shape_cast %161 : vector<8xf32> to vector<8x1xf32>
    %163 = vector.broadcast %162 : vector<8x1xf32> to vector<8x16xf32>
    %164 = arith.subf %160, %163 : vector<8x16xf32>
    %165 = math.exp %164 : vector<8x16xf32>
    %cst_68 = arith.constant dense<0.000000e+00> : vector<8xf32>
    %166 = vector.multi_reduction <add>, %165, %cst_68 [1] : vector<8x16xf32> to vector<8xf32>
    %167 = vector.shape_cast %166 : vector<8xf32> to vector<8x1xf32>
    %168 = tpu.reciprocal %167 {approx = true} : vector<8x1xf32> -> vector<8x1xf32>
    %169 = vector.broadcast %168 : vector<8x1xf32> to vector<8x16xf32>
    %170 = arith.mulf %165, %169 : vector<8x16xf32>
    %171 = vector.extract_strided_slice %63 {offsets = [0, 56], sizes = [16, 8], strides = [1, 1]} : vector<32x64xf32> to vector<16x8xf32>
    %cst_69 = arith.constant dense<0.000000e+00> : vector<8x8xf32>
    %172 = tpu.matmul %170, %171, %cst_69 {dimension_numbers = #tpu.dot_dimension_numbers<[1], [0], [0], [1], [0, 0, 1, 1], [], []>} : vector<8x16xf32>, vector<16x8xf32>, vector<8x8xf32> -> vector<8x8xf32>
    %c0_70 = arith.constant 0 : index
    %c24 = arith.constant 24 : index
    %173 = vector.load %arg14[%c0_70, %c24] : memref<16x32xf32, #tpu.memory_space<vmem>>, vector<8x8xf32>
    tpu.vector_store %arg14[%c0_70, %c24], %172 {strides = array<i32>} : memref<16x32xf32, #tpu.memory_space<vmem>>, vector<8x8xf32>,
    %174 = vector.extract_strided_slice %159 {offsets = [0, 16], sizes = [8, 16], strides = [1, 1]} : vector<8x32xf32> to vector<8x16xf32>
    %cst_71 = arith.constant dense<0xFF800000> : vector<8xf32>
    %175 = vector.multi_reduction <maximumf>, %174, %cst_71 [1] : vector<8x16xf32> to vector<8xf32>
    %176 = vector.shape_cast %175 : vector<8xf32> to vector<8x1xf32>
    %177 = vector.broadcast %176 : vector<8x1xf32> to vector<8x16xf32>
    %178 = arith.subf %174, %177 : vector<8x16xf32>
    %179 = math.exp %178 : vector<8x16xf32>
    %cst_72 = arith.constant dense<0.000000e+00> : vector<8xf32>
    %180 = vector.multi_reduction <add>, %179, %cst_72 [1] : vector<8x16xf32> to vector<8xf32>
    %181 = vector.shape_cast %180 : vector<8xf32> to vector<8x1xf32>
    %182 = tpu.reciprocal %181 {approx = true} : vector<8x1xf32> -> vector<8x1xf32>
    %183 = vector.broadcast %182 : vector<8x1xf32> to vector<8x16xf32>
    %184 = arith.mulf %179, %183 : vector<8x16xf32>
    %185 = vector.extract_strided_slice %63 {offsets = [16, 56], sizes = [16, 8], strides = [1, 1]} : vector<32x64xf32> to vector<16x8xf32>
    %cst_73 = arith.constant dense<0.000000e+00> : vector<8x8xf32>
    %186 = tpu.matmul %184, %185, %cst_73 {dimension_numbers = #tpu.dot_dimension_numbers<[1], [0], [0], [1], [0, 0, 1, 1], [], []>} : vector<8x16xf32>, vector<16x8xf32>, vector<8x8xf32> -> vector<8x8xf32>
    %c8_74 = arith.constant 8 : index
    %c24_75 = arith.constant 24 : index
    %187 = vector.load %arg14[%c8_74, %c24_75] : memref<16x32xf32, #tpu.memory_space<vmem>>, vector<8x8xf32>
    tpu.vector_store %arg14[%c8_74, %c24_75], %186 {strides = array<i32>} : memref<16x32xf32, #tpu.memory_space<vmem>>, vector<8x8xf32>,
    %c0_76 = arith.constant 0 : index
    %c0_77 = arith.constant 0 : index
    %188 = vector.load %arg14[%c0_76, %c0_77] : memref<16x32xf32, #tpu.memory_space<vmem>>, vector<16x32xf32>
    %c0_78 = arith.constant 0 : index
    %c0_79 = arith.constant 0 : index
    %189 = vector.load %arg12[%c0_78, %c0_79] : memref<32x32xf32, #tpu.memory_space<vmem>>, vector<32x32xf32>
    %cst_80 = arith.constant dense<0.000000e+00> : vector<16x32xf32>
    %190 = tpu.matmul %188, %189, %cst_80 {dimension_numbers = #tpu.dot_dimension_numbers<[1], [0], [0], [1], [0, 0, 1, 1], [], []>} : vector<16x32xf32>, vector<32x32xf32>, vector<16x32xf32> -> vector<16x32xf32>
    %c0_81 = arith.constant 0 : index
    %c0_82 = arith.constant 0 : index
    %191 = vector.load %arg13[%c0_81, %c0_82] : memref<1x32xf32, #tpu.memory_space<vmem>>, vector<1x32xf32>
    %192 = vector.broadcast %191 : vector<1x32xf32> to vector<16x32xf32>
    %193 = arith.addf %190, %192 : vector<16x32xf32>
    %c0_83 = arith.constant 0 : index
    %c0_84 = arith.constant 0 : index
    %194 = vector.load %arg14[%c0_83, %c0_84] : memref<16x32xf32, #tpu.memory_space<vmem>>, vector<16x32xf32>
    tpu.vector_store %arg14[%c0_83, %c0_84], %193 {strides = array<i32>} : memref<16x32xf32, #tpu.memory_space<vmem>>, vector<16x32xf32>,
    return
  }
}

</mosaic_0001>

<llo_original>
// kernel: tpu_custom_call.1
$region0: #{tpu_custom_call.1}
  #allocation0 [shape = 'u32[]', space=smem, size = 0x4, offset = 0x4, fixed_abs, tag = 'smem constant byte address 0x4 - core index']
  #allocation1 [shape = 'u32[144,128]{1,0:T(1,128)}', space=vmem, size = 0x12000, scoped, tag = 'internal scratch']
  %s0 = inlined_call_operand.vmem [shape: f32[32,64], index: 0, kind: input, shape index: {}]
  %s1 = inlined_call_operand.vmem [shape: f32[64,32], index: 1, kind: input, shape index: {}]
  %s2 = inlined_call_operand.vmem [shape: f32[1,32], index: 2, kind: input, shape index: {}]
  %s3 = inlined_call_operand.vmem [shape: f32[1,32], index: 3, kind: input, shape index: {}]
  %s4 = inlined_call_operand.hbm [shape: f32[8,32], index: 4, kind: input, shape index: {}]
  %s5 = inlined_call_operand.hbm [shape: f32[8,32], index: 5, kind: input, shape index: {}]
  %s6 = inlined_call_operand.hbm [shape: f32[1,32], index: 6, kind: input, shape index: {}]
  %s7 = inlined_call_operand.hbm [shape: f32[1,32], index: 7, kind: input, shape index: {}]
  %s8 = inlined_call_operand.vmem [shape: f32[32,32], index: 8, kind: input, shape index: {}]
  %s9 = inlined_call_operand.hbm [shape: f32[1,32], index: 9, kind: input, shape index: {}]
  %s10 = inlined_call_operand.vmem [shape: f32[32,64], index: 10, kind: input, shape index: {}]
  %s11 = inlined_call_operand.vmem [shape: f32[1,64], index: 11, kind: input, shape index: {}]
  %s12 = inlined_call_operand.vmem [shape: f32[32,32], index: 12, kind: input, shape index: {}]
  %s13 = inlined_call_operand.vmem [shape: f32[1,32], index: 13, kind: input, shape index: {}]
  %s14 = inlined_call_operand.hbm [shape: f32[16,32], index: 14, kind: output, shape index: {}]
  %s15 = sld [smem:[#allocation0]]
  $region86: #{tpu_custom_call.1} parent=0
    _
  %s17 = ssub.s32 1, %s15
  %s18 = scalar_select 0, %s17, %s15
  $region1: #{tpu_custom_call.1} parent=0
    #allocation2 [shape = 'u8[4096]{0}', space=vmem, size = 0x1000, scoped, tag = 'input window, operand 4, single buffered']
    #allocation3 [shape = 's32[1]{0}', space=sflag, size = 0x4, scoped, tag = 'scoped memory for tpu_custom_call.1']
    #allocation4 [shape = 's32[1]{0}', space=sflag, size = 0x4, scoped, tag = 'scoped memory for tpu_custom_call.1']
    #allocation5 [shape = 'u8[4096]{0}', space=vmem, size = 0x1000, scoped, tag = 'input window, operand 5, single buffered']
    #allocation6 [shape = 's32[1]{0}', space=sflag, size = 0x4, scoped, tag = 'scoped memory for tpu_custom_call.1']
    #allocation7 [shape = 'u8[512]{0}', space=vmem, size = 0x400, scoped, tag = 'input window, operand 6, single buffered']
    #allocation8 [shape = 'u8[512]{0}', space=vmem, size = 0x400, scoped, tag = 'input window, operand 7, single buffered']
    #allocation9 [shape = 's32[1]{0}', space=sflag, size = 0x4, scoped, tag = 'scoped memory for tpu_custom_call.1']
    #allocation10 [shape = 'u8[512]{0}', space=vmem, size = 0x400, scoped, tag = 'input window, operand 9, single buffered']
    #allocation11 [shape = 'u8[8192]{0}', space=vmem, size = 0x2000, scoped, tag = 'output window, operand 0, single buffered']
    %19 = vsyncpa [#allocation3], 0
    %20 = vsyncpa [#allocation6], 0
    %21 = vsyncpa [#allocation9], 0
    %22 = vsyncpa [#allocation4], 0
    // Predicated region
    $region2: #{tpu_custom_call.1} parent=1 // pred_check
      _
    $region3: #{tpu_custom_call.1} parent=1 // pred_check_branch
      %24 = sbr.rel (0) target = $region5
    $region4: #{tpu_custom_call.1} parent=1 // pred_region
      _
    $region5: #{tpu_custom_call.1} parent=1 // pred_fallthru
      _
    // Predicated region
    $region6: #{tpu_custom_call.1} parent=1 // pred_check
      _
    $region7: #{tpu_custom_call.1} parent=1 // pred_check_branch
      %26 = sbr.rel (0) target = $region9
    $region8: #{tpu_custom_call.1} parent=1 // pred_region
      _
    $region9: #{tpu_custom_call.1} parent=1 // pred_fallthru
      _
    // Predicated region
    $region10: #{tpu_custom_call.1} parent=1 // pred_check
      _
    $region11: #{tpu_custom_call.1} parent=1 // pred_check_branch
      %28 = sbr.rel (0) target = $region13
    $region12: #{tpu_custom_call.1} parent=1 // pred_region
      _
    $region13: #{tpu_custom_call.1} parent=1 // pred_fallthru
      _
    // Predicated region
    $region14: #{tpu_custom_call.1} parent=1 // pred_check
      _
    $region15: #{tpu_custom_call.1} parent=1 // pred_check_branch
      %30 = sbr.rel (0) target = $region17
    $region16: #{tpu_custom_call.1} parent=1 // pred_region
      _
    $region17: #{tpu_custom_call.1} parent=1 // pred_fallthru
      _
    // Predicated region
    $region18: #{tpu_custom_call.1} parent=1 // pred_check
      _
    $region19: #{tpu_custom_call.1} parent=1 // pred_check_branch
      %32 = sbr.rel (0) target = $region21
    $region20: #{tpu_custom_call.1} parent=1 // pred_region
      %s34 = ssub.s32 128, 128
      %35 = vsyncadd [#allocation3], %s34
      %s37 = sshll.u32 [#allocation2], 4
      %s38 = int_to_ptr.vmem [resolvable:$true] %s37
      %40 = dma.hbm_to_vmem [thread:$0]  %s4, 128, %s38, [#allocation3]
    $region21: #{tpu_custom_call.1} parent=1 // pred_fallthru
      _
    // Predicated region
    $region22: #{tpu_custom_call.1} parent=1 // pred_check
      _
    $region23: #{tpu_custom_call.1} parent=1 // pred_check_branch
      %42 = sbr.rel (0) target = $region25
    $region24: #{tpu_custom_call.1} parent=1 // pred_region
      %s44 = ssub.s32 128, 128
      %45 = vsyncadd [#allocation6], %s44
      %s47 = sshll.u32 [#allocation5], 4
      %s48 = int_to_ptr.vmem [resolvable:$true] %s47
      %50 = dma.hbm_to_vmem [thread:$0]  %s5, 128, %s48, [#allocation6]
    $region25: #{tpu_custom_call.1} parent=1 // pred_fallthru
      _
    // Predicated region
    $region26: #{tpu_custom_call.1} parent=1 // pred_check
      _
    $region27: #{tpu_custom_call.1} parent=1 // pred_check_branch
      %52 = sbr.rel (0) target = $region29
    $region28: #{tpu_custom_call.1} parent=1 // pred_region
      %s54 = ssub.s32 16, 16
      %55 = vsyncadd [#allocation6], %s54
      %s57 = sshll.u32 [#allocation7], 4
      %s58 = int_to_ptr.vmem [resolvable:$true] %s57
      %60 = dma.hbm_to_vmem [thread:$0]  %s6, 16, %s58, [#allocation6]
    $region29: #{tpu_custom_call.1} parent=1 // pred_fallthru
      _
    // Predicated region
    $region30: #{tpu_custom_call.1} parent=1 // pred_check
      _
    $region31: #{tpu_custom_call.1} parent=1 // pred_check_branch
      %62 = sbr.rel (0) target = $region33
    $region32: #{tpu_custom_call.1} parent=1 // pred_region
      %s64 = ssub.s32 16, 16
      %65 = vsyncadd [#allocation9], %s64
      %s67 = sshll.u32 [#allocation8], 4
      %s68 = int_to_ptr.vmem [resolvable:$true] %s67
      %70 = dma.hbm_to_vmem [thread:$0]  %s7, 16, %s68, [#allocation9]
    $region33: #{tpu_custom_call.1} parent=1 // pred_fallthru
      _
    // Predicated region
    $region34: #{tpu_custom_call.1} parent=1 // pred_check
      _
    $region35: #{tpu_custom_call.1} parent=1 // pred_check_branch
      %72 = sbr.rel (0) target = $region37
    $region36: #{tpu_custom_call.1} parent=1 // pred_region
      _
    $region37: #{tpu_custom_call.1} parent=1 // pred_fallthru
      _
    // Predicated region
    $region38: #{tpu_custom_call.1} parent=1 // pred_check
      _
    $region39: #{tpu_custom_call.1} parent=1 // pred_check_branch
      %74 = sbr.rel (0) target = $region41
    $region40: #{tpu_custom_call.1} parent=1 // pred_region
      %s76 = ssub.s32 16, 16
      %77 = vsyncadd [#allocation9], %s76
      %s79 = sshll.u32 [#allocation10], 4
      %s80 = int_to_ptr.vmem [resolvable:$true] %s79
      %82 = dma.hbm_to_vmem [thread:$0]  %s9, 16, %s80, [#allocation9]
    $region41: #{tpu_custom_call.1} parent=1 // pred_fallthru
      _
    // Predicated region
    $region42: #{tpu_custom_call.1} parent=1 // pred_check
      _
    $region43: #{tpu_custom_call.1} parent=1 // pred_check_branch
      %84 = sbr.rel (0) target = $region45
    $region44: #{tpu_custom_call.1} parent=1 // pred_region
      _
    $region45: #{tpu_custom_call.1} parent=1 // pred_fallthru
      _
    // Predicated region
    $region46: #{tpu_custom_call.1} parent=1 // pred_check
      _
    $region47: #{tpu_custom_call.1} parent=1 // pred_check_branch
      %86 = sbr.rel (0) target = $region49
    $region48: #{tpu_custom_call.1} parent=1 // pred_region
      _
    $region49: #{tpu_custom_call.1} parent=1 // pred_fallthru
      _
    // Predicated region
    $region50: #{tpu_custom_call.1} parent=1 // pred_check
      _
    $region51: #{tpu_custom_call.1} parent=1 // pred_check_branch
      %88 = sbr.rel (0) target = $region53
    $region52: #{tpu_custom_call.1} parent=1 // pred_region
      _
    $region53: #{tpu_custom_call.1} parent=1 // pred_fallthru
      _
    // Predicated region
    $region54: #{tpu_custom_call.1} parent=1 // pred_check
      _
    $region55: #{tpu_custom_call.1} parent=1 // pred_check_branch
      %90 = sbr.rel (0) target = $region57
    $region56: #{tpu_custom_call.1} parent=1 // pred_region
      _
    $region57: #{tpu_custom_call.1} parent=1 // pred_fallthru
      _
    // Predicated region
    $region58: #{tpu_custom_call.1} parent=1 // pred_check
      _
    $region59: #{tpu_custom_call.1} parent=1 // pred_check_branch
      %92 = sbr.rel (0) target = $region61
    $region60: #{tpu_custom_call.1} parent=1 // pred_region
      %93 = dma.done [#allocation3], 128
    $region61: #{tpu_custom_call.1} parent=1 // pred_fallthru
      _
    // Predicated region
    $region62: #{tpu_custom_call.1} parent=1 // pred_check
      _
    $region63: #{tpu_custom_call.1} parent=1 // pred_check_branch
      %95 = sbr.rel (0) target = $region65
    $region64: #{tpu_custom_call.1} parent=1 // pred_region
      %96 = dma.done [#allocation6], 128
    $region65: #{tpu_custom_call.1} parent=1 // pred_fallthru
      _
    // Predicated region
    $region66: #{tpu_custom_call.1} parent=1 // pred_check
      _
    $region67: #{tpu_custom_call.1} parent=1 // pred_check_branch
      %98 = sbr.rel (0) target = $region69
    $region68: #{tpu_custom_call.1} parent=1 // pred_region
      %99 = dma.done [#allocation6], 16
    $region69: #{tpu_custom_call.1} parent=1 // pred_fallthru
      _
    // Predicated region
    $region70: #{tpu_custom_call.1} parent=1 // pred_check
      _
    $region71: #{tpu_custom_call.1} parent=1 // pred_check_branch
      %101 = sbr.rel (0) target = $region73
    $region72: #{tpu_custom_call.1} parent=1 // pred_region
      %102 = dma.done [#allocation9], 16
    $region73: #{tpu_custom_call.1} parent=1 // pred_fallthru
      _
    // Predicated region
    $region74: #{tpu_custom_call.1} parent=1 // pred_check
      _
    $region75: #{tpu_custom_call.1} parent=1 // pred_check_branch
      %104 = sbr.rel (0) target = $region77
    $region76: #{tpu_custom_call.1} parent=1 // pred_region
      %105 = dma.done [#allocation9], 16
    $region77: #{tpu_custom_call.1} parent=1 // pred_fallthru
      _
    %v106 = vld [vmem:[%s0] sm:$0xff]
    %v107 = vld [vmem:[%s0 + $0x8] sm:$0xff]
    %v108 = vld [vmem:[%s0 + $0x10] sm:$0xff]
    %v109 = vld [vmem:[%s0 + $0x18] sm:$0xff]
    %v110 = vld [vmem:[%s1] sm:$0xff]
    %v111 = vld [vmem:[%s1 + $0x8] sm:$0xff]
    %v112 = vld [vmem:[%s1 + $0x10] sm:$0xff]
    %v113 = vld [vmem:[%s1 + $0x18] sm:$0xff]
    %v114 = vld [vmem:[%s1 + $0x20] sm:$0xff]
    %v115 = vld [vmem:[%s1 + $0x28] sm:$0xff]
    %v116 = vld [vmem:[%s1 + $0x30] sm:$0xff]
    %v117 = vld [vmem:[%s1 + $0x38] sm:$0xff]
    %vm118 = vcmask 523264
    %v120 = vsel %vm118, %v106, 0
    %v123 = vsel %vm118, %v107, 0
    %v126 = vsel %vm118, %v108, 0
    %v129 = vsel %vm118, %v109, 0
    %131 = vmatprep.subr.mxu0 0.0
    %132 = vmatpush1.msra.mxu0 %v110
    %133 = vmatprep.subr.mxu0 0.0
    %134 = vmatpush1.msra.mxu0 %v111
    %135 = vmatprep.subr.mxu0 0.0
    %136 = vmatpush1.msra.mxu0 %v112
    %137 = vmatprep.subr.mxu0 0.0
    %138 = vmatpush1.msra.mxu0 %v113
    %139 = vmatprep.subr.mxu0 0.0
    %140 = vmatpush1.msra.mxu0 %v114
    %141 = vmatprep.subr.mxu0 0.0
    %142 = vmatpush1.msra.mxu0 %v115
    %143 = vmatprep.subr.mxu0 0.0
    %144 = vmatpush1.msra.mxu0 %v116
    %145 = vmatprep.subr.mxu0 0.0
    %146 = vmatpush1.msra.mxu0 %v117
    %147 = vmatprep.subr.mxu0 0.0
    %148 = vmatpush1.msra.mxu0 0.0
    %149 = vmatprep.subr.mxu0 0.0
    %150 = vmatpush1.msra.mxu0 0.0
    %151 = vmatprep.subr.mxu0 0.0
    %152 = vmatpush1.msra.mxu0 0.0
    %153 = vmatprep.subr.mxu0 0.0
    %154 = vmatpush1.msra.mxu0 0.0
    %155 = vmatprep.subr.mxu0 0.0
    %156 = vmatpush1.msra.mxu0 0.0
    %157 = vmatprep.subr.mxu0 0.0
    %158 = vmatpush1.msra.mxu0 0.0
    %159 = vmatprep.subr.mxu0 0.0
    %160 = vmatpush1.msra.mxu0 0.0
    %161 = vmatprep.subr.mxu0 0.0
    %162 = vmatpush1.msra.mxu0 0.0
    %163 = vmatprep.subr.mxu0 0.0
    %164 = vmatpush1.msra.mxu0 0.0
    %165 = vmatprep.subr.mxu0 0.0
    %166 = vmatpush1.msra.mxu0 0.0
    %167 = vmatprep.subr.mxu0 0.0
    %168 = vmatpush1.msra.mxu0 0.0
    %169 = vmatprep.subr.mxu0 0.0
    %170 = vmatpush1.msra.mxu0 0.0
    %171 = vmatprep.subr.mxu0 0.0
    %172 = vmatpush1.msra.mxu0 0.0
    %173 = vmatprep.subr.mxu0 0.0
    %174 = vmatpush1.msra.mxu0 0.0
    %175 = vmatprep.subr.mxu0 0.0
    %176 = vmatpush1.msra.mxu0 0.0
    %177 = vmatprep.subr.mxu0 0.0
    %178 = vmatpush1.msra.mxu0 0.0
    %179 = vmatprep.subr.mxu0 0.0
    %180 = vmatpush1.msra.mxu0 0.0
    %181 = vmatprep.subr.mxu0 0.0
    %182 = vmatpush1.msra.mxu0 0.0
    %183 = vmatprep.subr.mxu0 0.0
    %184 = vmatpush1.msra.mxu0 0.0
    %185 = vmatprep.subr.mxu0 0.0
    %186 = vmatpush1.msra.mxu0 0.0
    %187 = vmatprep.subr.mxu0 0.0
    %188 = vmatpush1.msra.mxu0 0.0
    %189 = vmatprep.subr.mxu0 0.0
    %190 = vmatpush1.msra.mxu0 0.0
    %191 = vmatprep.subr.mxu0 0.0
    %192 = vmatpush1.msra.mxu0 0.0
    %193 = vmatprep.subr.mxu0 0.0
    %194 = vmatpush1.msra.mxu0 0.0
    %195 = vmatprep.mubr.f32.mxu0 0.0
    %196 = vmatmul.mubr.f32.gmra.mrb[0].mxu0 %v120
    %v197 = vpop.f32.mrb[0].mxu0
    %v198 = vadd.f32 0.0, %v197
    %v199 = vpop.f32.mrb[0].mxu0
    %200 = vmatprep.mubr.f32.mxu0 0.0
    %201 = vmatmul.mubr.f32.gmra.mrb[0].mxu0 %v123
    %v202 = vpop.f32.mrb[0].mxu0
    %v203 = vadd.f32 0.0, %v202
    %v204 = vpop.f32.mrb[0].mxu0
    %205 = vmatprep.mubr.f32.mxu0 0.0
    %206 = vmatmul.mubr.f32.gmra.mrb[0].mxu0 %v126
    %v207 = vpop.f32.mrb[0].mxu0
    %v208 = vadd.f32 0.0, %v207
    %v209 = vpop.f32.mrb[0].mxu0
    %210 = vmatprep.mubr.f32.mxu0 0.0
    %211 = vmatmul.mubr.f32.gmra.mrb[0].mxu0 %v129
    %v212 = vpop.f32.mrb[0].mxu0
    %v213 = vadd.f32 0.0, %v212
    %v214 = vpop.f32.mrb[0].mxu0
    %215 = vdwg.mxu0
    %vm216 = vcmask 261120
    %v217 = vsel %vm216, %v198, 0.0
    %218 = vadd.xlane.f32.xlu0 %v217
    %v219 = vpop.xlane.xlu0 %218
    %v220 = vsel %vm216, %v203, 0.0
    %221 = vadd.xlane.f32.xlu0 %v220
    %v222 = vpop.xlane.xlu0 %221
    %v223 = vsel %vm216, %v208, 0.0
    %224 = vadd.xlane.f32.xlu0 %v223
    %v225 = vpop.xlane.xlu0 %224
    %v226 = vsel %vm216, %v213, 0.0
    %227 = vadd.xlane.f32.xlu0 %v226
    %v228 = vpop.xlane.xlu0 %227
    %v229 = vrcp.pop 32.0
    %v230 = vmul.f32 %v219, %v229
    %v231 = vmul.f32 %v222, %v229
    %v232 = vmul.f32 %v225, %v229
    %v233 = vmul.f32 %v228, %v229
    %v234 = vsub.f32 %v198, %v230
    %v235 = vsub.f32 %v203, %v231
    %v236 = vsub.f32 %v208, %v232
    %v237 = vsub.f32 %v213, %v233
    %v238 = vmul.f32 %v234, %v234
    %v239 = vmul.f32 %v235, %v235
    %v240 = vmul.f32 %v236, %v236
    %v241 = vmul.f32 %v237, %v237
    %v242 = vsel %vm216, %v238, 0.0
    %243 = vadd.xlane.f32.xlu0 %v242
    %v244 = vpop.xlane.xlu0 %243
    %v245 = vsel %vm216, %v239, 0.0
    %246 = vadd.xlane.f32.xlu0 %v245
    %v247 = vpop.xlane.xlu0 %246
    %v248 = vsel %vm216, %v240, 0.0
    %249 = vadd.xlane.f32.xlu0 %v248
    %v250 = vpop.xlane.xlu0 %249
    %v251 = vsel %vm216, %v241, 0.0
    %252 = vadd.xlane.f32.xlu0 %v251
    %v253 = vpop.xlane.xlu0 %252
    %v254 = vmul.f32 %v244, %v229
    %v255 = vmul.f32 %v247, %v229
    %v256 = vmul.f32 %v250, %v229
    %v257 = vmul.f32 %v253, %v229
    %v258 = vadd.f32 %v254, 1e-05
    %v259 = vadd.f32 %v255, 1e-05
    %v260 = vadd.f32 %v256, 1e-05
    %v261 = vadd.f32 %v257, 1e-05
    %v262 = vrsqrt.pop %v258
    %v263 = vrsqrt.pop %v259
    %v264 = vrsqrt.pop %v260
    %v265 = vrsqrt.pop %v261
    %v266 = vmul.f32 %v234, %v262
    %v267 = vmul.f32 %v235, %v263
    %v268 = vmul.f32 %v236, %v264
    %v269 = vmul.f32 %v237, %v265
    %v270 = vld [vmem:[%s2] sm:$0x1]
    %v272 = vlaneseq
    %v273 = vshrl.u32 %v272, 7
    %v274 = vsub.s32 0, %v273
    %v275 = vrot.slane %v270, %v274
    %v277 = vmul.f32 %v266, %v275
    %v278 = vmul.f32 %v267, %v275
    %v279 = vmul.f32 %v268, %v275
    %v280 = vmul.f32 %v269, %v275
    %v281 = vld [vmem:[%s3] sm:$0x1]
    %v283 = vlaneseq
    %v284 = vshrl.u32 %v283, 7
    %v285 = vsub.s32 0, %v284
    %v286 = vrot.slane %v281, %v285
    %v288 = vadd.f32 %v277, %v286
    %v289 = vadd.f32 %v278, %v286
    %v290 = vadd.f32 %v279, %v286
    %v291 = vadd.f32 %v280, %v286
    %v292 = vld [vmem:[#allocation2] sm:$0xff]
    %v293 = vsel %vm216, %v292, 0.0
    %294 = vadd.xlane.f32.xlu0 %v293
    %v295 = vpop.xlane.xlu0 %294
    %v296 = vmul.f32 %v295, %v229
    %v297 = vsub.f32 %v292, %v296
    %v298 = vmul.f32 %v297, %v297
    %v299 = vsel %vm216, %v298, 0.0
    %300 = vadd.xlane.f32.xlu0 %v299
    %v301 = vpop.xlane.xlu0 %300
    %v302 = vmul.f32 %v301, %v229
    %v303 = vadd.f32 %v302, 1e-05
    %v304 = vrsqrt.pop %v303
    %v305 = vmul.f32 %v297, %v304
    %v306 = vld [vmem:[#allocation7] sm:$0x1]
    %v308 = vlaneseq
    %v309 = vshrl.u32 %v308, 7
    %v310 = vsub.s32 0, %v309
    %v311 = vrot.slane %v306, %v310
    %v313 = vmul.f32 %v305, %v311
    %v314 = vld [vmem:[#allocation8] sm:$0x1]
    %v316 = vlaneseq
    %v317 = vshrl.u32 %v316, 7
    %v318 = vsub.s32 0, %v317
    %v319 = vrot.slane %v314, %v318
    %v321 = vadd.f32 %v313, %v319
    %v322 = vld [vmem:[#allocation5] sm:$0xff]
    %v323 = vadd.f32 %v321, %v322
    %v324 = vld [vmem:[%s8] sm:$0xff]
    %v325 = vld [vmem:[%s8 + $0x8] sm:$0xff]
    %v326 = vld [vmem:[%s8 + $0x10] sm:$0xff]
    %v327 = vld [vmem:[%s8 + $0x18] sm:$0xff]
    %v328 = vld [vmem:[#allocation10] sm:$0x1]
    %v330 = vlaneseq
    %v331 = vshrl.u32 %v330, 7
    %v332 = vsub.s32 0, %v331
    %v333 = vrot.slane %v328, %v332
    %v336 = vsel %vm216, %v323, 0
    %338 = vmatprep.subr.mxu0 0.0
    %339 = vmatpush1.msra.mxu0 %v324
    %340 = vmatprep.subr.mxu0 0.0
    %341 = vmatpush1.msra.mxu0 %v325
    %342 = vmatprep.subr.mxu0 0.0
    %343 = vmatpush1.msra.mxu0 %v326
    %344 = vmatprep.subr.mxu0 0.0
    %345 = vmatpush1.msra.mxu0 %v327
    %346 = vmatprep.subr.mxu0 0.0
    %347 = vmatpush1.msra.mxu0 0.0
    %348 = vmatprep.subr.mxu0 0.0
    %349 = vmatpush1.msra.mxu0 0.0
    %350 = vmatprep.subr.mxu0 0.0
    %351 = vmatpush1.msra.mxu0 0.0
    %352 = vmatprep.subr.mxu0 0.0
    %353 = vmatpush1.msra.mxu0 0.0
    %354 = vmatprep.subr.mxu0 0.0
    %355 = vmatpush1.msra.mxu0 0.0
    %356 = vmatprep.subr.mxu0 0.0
    %357 = vmatpush1.msra.mxu0 0.0
    %358 = vmatprep.subr.mxu0 0.0
    %359 = vmatpush1.msra.mxu0 0.0
    %360 = vmatprep.subr.mxu0 0.0
    %361 = vmatpush1.msra.mxu0 0.0
    %362 = vmatprep.subr.mxu0 0.0
    %363 = vmatpush1.msra.mxu0 0.0
    %364 = vmatprep.subr.mxu0 0.0
    %365 = vmatpush1.msra.mxu0 0.0
    %366 = vmatprep.subr.mxu0 0.0
    %367 = vmatpush1.msra.mxu0 0.0
    %368 = vmatprep.subr.mxu0 0.0
    %369 = vmatpush1.msra.mxu0 0.0
    %370 = vmatprep.subr.mxu0 0.0
    %371 = vmatpush1.msra.mxu0 0.0
    %372 = vmatprep.subr.mxu0 0.0
    %373 = vmatpush1.msra.mxu0 0.0
    %374 = vmatprep.subr.mxu0 0.0
    %375 = vmatpush1.msra.mxu0 0.0
    %376 = vmatprep.subr.mxu0 0.0
    %377 = vmatpush1.msra.mxu0 0.0
    %378 = vmatprep.subr.mxu0 0.0
    %379 = vmatpush1.msra.mxu0 0.0
    %380 = vmatprep.subr.mxu0 0.0
    %381 = vmatpush1.msra.mxu0 0.0
    %382 = vmatprep.subr.mxu0 0.0
    %383 = vmatpush1.msra.mxu0 0.0
    %384 = vmatprep.subr.mxu0 0.0
    %385 = vmatpush1.msra.mxu0 0.0
    %386 = vmatprep.subr.mxu0 0.0
    %387 = vmatpush1.msra.mxu0 0.0
    %388 = vmatprep.subr.mxu0 0.0
    %389 = vmatpush1.msra.mxu0 0.0
    %390 = vmatprep.subr.mxu0 0.0
    %391 = vmatpush1.msra.mxu0 0.0
    %392 = vmatprep.subr.mxu0 0.0
    %393 = vmatpush1.msra.mxu0 0.0
    %394 = vmatprep.subr.mxu0 0.0
    %395 = vmatpush1.msra.mxu0 0.0
    %396 = vmatprep.subr.mxu0 0.0
    %397 = vmatpush1.msra.mxu0 0.0
    %398 = vmatprep.subr.mxu0 0.0
    %399 = vmatpush1.msra.mxu0 0.0
    %400 = vmatprep.subr.mxu0 0.0
    %401 = vmatpush1.msra.mxu0 0.0
    %402 = vmatprep.mubr.f32.mxu0 0.0
    %403 = vmatmul.mubr.f32.gmra.mrb[0].mxu0 %v336
    %v404 = vpop.f32.mrb[0].mxu0
    %v405 = vadd.f32 %v333, %v404
    %v406 = vpop.f32.mrb[0].mxu0
    %407 = vdwg.mxu0
    %v408 = vld [vmem:[%s10] sm:$0xff]
    %v409 = vld [vmem:[%s10 + $0x8] sm:$0xff]
    %v410 = vld [vmem:[%s10 + $0x10] sm:$0xff]
    %v411 = vld [vmem:[%s10 + $0x18] sm:$0xff]
    %v412 = vld [vmem:[%s11] sm:$0x1]
    %v414 = vlaneseq
    %v415 = vshrl.u32 %v414, 7
    %v416 = vsub.s32 0, %v415
    %v417 = vrot.slane %v412, %v416
    %v420 = vsel %vm216, %v288, 0
    %v423 = vsel %vm216, %v289, 0
    %v426 = vsel %vm216, %v290, 0
    %v429 = vsel %vm216, %v291, 0
    %431 = vmatprep.subr.mxu0 0.0
    %432 = vmatpush1.msra.mxu0 %v408
    %433 = vmatprep.subr.mxu0 0.0
    %434 = vmatpush1.msra.mxu0 %v409
    %435 = vmatprep.subr.mxu0 0.0
    %436 = vmatpush1.msra.mxu0 %v410
    %437 = vmatprep.subr.mxu0 0.0
    %438 = vmatpush1.msra.mxu0 %v411
    %439 = vmatprep.subr.mxu0 0.0
    %440 = vmatpush1.msra.mxu0 0.0
    %441 = vmatprep.subr.mxu0 0.0
    %442 = vmatpush1.msra.mxu0 0.0
    %443 = vmatprep.subr.mxu0 0.0
    %444 = vmatpush1.msra.mxu0 0.0
    %445 = vmatprep.subr.mxu0 0.0
    %446 = vmatpush1.msra.mxu0 0.0
    %447 = vmatprep.subr.mxu0 0.0
    %448 = vmatpush1.msra.mxu0 0.0
    %449 = vmatprep.subr.mxu0 0.0
    %450 = vmatpush1.msra.mxu0 0.0
    %451 = vmatprep.subr.mxu0 0.0
    %452 = vmatpush1.msra.mxu0 0.0
    %453 = vmatprep.subr.mxu0 0.0
    %454 = vmatpush1.msra.mxu0 0.0
    %455 = vmatprep.subr.mxu0 0.0
    %456 = vmatpush1.msra.mxu0 0.0
    %457 = vmatprep.subr.mxu0 0.0
    %458 = vmatpush1.msra.mxu0 0.0
    %459 = vmatprep.subr.mxu0 0.0
    %460 = vmatpush1.msra.mxu0 0.0
    %461 = vmatprep.subr.mxu0 0.0
    %462 = vmatpush1.msra.mxu0 0.0
    %463 = vmatprep.subr.mxu0 0.0
    %464 = vmatpush1.msra.mxu0 0.0
    %465 = vmatprep.subr.mxu0 0.0
    %466 = vmatpush1.msra.mxu0 0.0
    %467 = vmatprep.subr.mxu0 0.0
    %468 = vmatpush1.msra.mxu0 0.0
    %469 = vmatprep.subr.mxu0 0.0
    %470 = vmatpush1.msra.mxu0 0.0
    %471 = vmatprep.subr.mxu0 0.0
    %472 = vmatpush1.msra.mxu0 0.0
    %473 = vmatprep.subr.mxu0 0.0
    %474 = vmatpush1.msra.mxu0 0.0
    %475 = vmatprep.subr.mxu0 0.0
    %476 = vmatpush1.msra.mxu0 0.0
    %477 = vmatprep.subr.mxu0 0.0
    %478 = vmatpush1.msra.mxu0 0.0
    %479 = vmatprep.subr.mxu0 0.0
    %480 = vmatpush1.msra.mxu0 0.0
    %481 = vmatprep.subr.mxu0 0.0
    %482 = vmatpush1.msra.mxu0 0.0
    %483 = vmatprep.subr.mxu0 0.0
    %484 = vmatpush1.msra.mxu0 0.0
    %485 = vmatprep.subr.mxu0 0.0
    %486 = vmatpush1.msra.mxu0 0.0
    %487 = vmatprep.subr.mxu0 0.0
    %488 = vmatpush1.msra.mxu0 0.0
    %489 = vmatprep.subr.mxu0 0.0
    %490 = vmatpush1.msra.mxu0 0.0
    %491 = vmatprep.subr.mxu0 0.0
    %492 = vmatpush1.msra.mxu0 0.0
    %493 = vmatprep.subr.mxu0 0.0
    %494 = vmatpush1.msra.mxu0 0.0
    %495 = vmatprep.mubr.f32.mxu0 0.0
    %496 = vmatmul.mubr.f32.gmra.mrb[0].mxu0 %v420
    %v497 = vpop.f32.mrb[0].mxu0
    %v498 = vadd.f32 %v417, %v497
    %v499 = vpop.f32.mrb[0].mxu0
    %500 = vmatprep.mubr.f32.mxu0 0.0
    %501 = vmatmul.mubr.f32.gmra.mrb[0].mxu0 %v423
    %v502 = vpop.f32.mrb[0].mxu0
    %v503 = vadd.f32 %v417, %v502
    %v504 = vpop.f32.mrb[0].mxu0
    %505 = vmatprep.mubr.f32.mxu0 0.0
    %506 = vmatmul.mubr.f32.gmra.mrb[0].mxu0 %v426
    %v507 = vpop.f32.mrb[0].mxu0
    %v508 = vadd.f32 %v417, %v507
    %v509 = vpop.f32.mrb[0].mxu0
    %510 = vmatprep.mubr.f32.mxu0 0.0
    %511 = vmatmul.mubr.f32.gmra.mrb[0].mxu0 %v429
    %v512 = vpop.f32.mrb[0].mxu0
    %v513 = vadd.f32 %v417, %v512
    %v514 = vpop.f32.mrb[0].mxu0
    %515 = vdwg.mxu0
    %vm516 = vcmask 64512
    %v518 = vsel %vm516, %v405, 0
    %v521 = vsel %vm516, %v498, 0
    %v524 = vsel %vm516, %v503, 0
    %v527 = vsel %vm516, %v508, 0
    %v530 = vsel %vm516, %v513, 0
    %532 = vmatprep.subr.mxu0 0.0
    %533 = vmatpush1.xpose.msra.mxu0 %v521
    %534 = vmatprep.subr.mxu0 0.0
    %535 = vmatpush1.xpose.msra.mxu0 %v524
    %536 = vmatprep.subr.mxu0 0.0
    %537 = vmatpush1.xpose.msra.mxu0 %v527
    %538 = vmatprep.subr.mxu0 0.0
    %539 = vmatpush1.xpose.msra.mxu0 %v530
    %540 = vmatprep.subr.mxu0 0.0
    %541 = vmatpush1.xpose.msra.mxu0 0.0
    %542 = vmatprep.subr.mxu0 0.0
    %543 = vmatpush1.xpose.msra.mxu0 0.0
    %544 = vmatprep.subr.mxu0 0.0
    %545 = vmatpush1.xpose.msra.mxu0 0.0
    %546 = vmatprep.subr.mxu0 0.0
    %547 = vmatpush1.xpose.msra.mxu0 0.0
    %548 = vmatprep.subr.mxu0 0.0
    %549 = vmatpush1.xpose.msra.mxu0 0.0
    %550 = vmatprep.subr.mxu0 0.0
    %551 = vmatpush1.xpose.msra.mxu0 0.0
    %552 = vmatprep.subr.mxu0 0.0
    %553 = vmatpush1.xpose.msra.mxu0 0.0
    %554 = vmatprep.subr.mxu0 0.0
    %555 = vmatpush1.xpose.msra.mxu0 0.0
    %556 = vmatprep.subr.mxu0 0.0
    %557 = vmatpush1.xpose.msra.mxu0 0.0
    %558 = vmatprep.subr.mxu0 0.0
    %559 = vmatpush1.xpose.msra.mxu0 0.0
    %560 = vmatprep.subr.mxu0 0.0
    %561 = vmatpush1.xpose.msra.mxu0 0.0
    %562 = vmatprep.subr.mxu0 0.0
    %563 = vmatpush1.xpose.msra.mxu0 0.0
    %564 = vmatprep.subr.mxu0 0.0
    %565 = vmatpush1.xpose.msra.mxu0 0.0
    %566 = vmatprep.subr.mxu0 0.0
    %567 = vmatpush1.xpose.msra.mxu0 0.0
    %568 = vmatprep.subr.mxu0 0.0
    %569 = vmatpush1.xpose.msra.mxu0 0.0
    %570 = vmatprep.subr.mxu0 0.0
    %571 = vmatpush1.xpose.msra.mxu0 0.0
    %572 = vmatprep.subr.mxu0 0.0
    %573 = vmatpush1.xpose.msra.mxu0 0.0
    %574 = vmatprep.subr.mxu0 0.0
    %575 = vmatpush1.xpose.msra.mxu0 0.0
    %576 = vmatprep.subr.mxu0 0.0
    %577 = vmatpush1.xpose.msra.mxu0 0.0
    %578 = vmatprep.subr.mxu0 0.0
    %579 = vmatpush1.xpose.msra.mxu0 0.0
    %580 = vmatprep.subr.mxu0 0.0
    %581 = vmatpush1.xpose.msra.mxu0 0.0
    %582 = vmatprep.subr.mxu0 0.0
    %583 = vmatpush1.xpose.msra.mxu0 0.0
    %584 = vmatprep.subr.mxu0 0.0
    %585 = vmatpush1.xpose.msra.mxu0 0.0
    %586 = vmatprep.subr.mxu0 0.0
    %587 = vmatpush1.xpose.msra.mxu0 0.0
    %588 = vmatprep.subr.mxu0 0.0
    %589 = vmatpush1.xpose.msra.mxu0 0.0
    %590 = vmatprep.subr.mxu0 0.0
    %591 = vmatpush1.xpose.msra.mxu0 0.0
    %592 = vmatprep.subr.mxu0 0.0
    %593 = vmatpush1.xpose.msra.mxu0 0.0
    %594 = vmatprep.subr.mxu0 0.0
    %595 = vmatpush1.xpose.msra.mxu0 0.0
    %596 = vmatprep.mubr.f32.mxu0 0.0
    %597 = vmatmul.mubr.f32.gmra.mrb[0].mxu0 %v518
    %v598 = vpop.f32.mrb[0].mxu0
    %v599 = vadd.f32 0.0, %v598
    %v600 = vpop.f32.mrb[0].mxu0
    %601 = vdwg.mxu0
    %vm602 = vcmask 130048
    %v603 = vsel %vm602, %v599, -inf
    %604 = vmax.xlane.f32.xlu0 %v603
    %v605 = vpop.xlane.xlu0 %604
    %v606 = vsub.f32 %v599, %v605
    %v607 = vmul.f32 %v606, 1.442695
    %v608 = vpow.pop %v607
    %v609 = vsel %vm602, %v608, 0.0
    %610 = vadd.xlane.f32.xlu0 %v609
    %v611 = vpop.xlane.xlu0 %610
    %v612 = vrcp.pop %v611
    %v613 = vmul.f32 %v608, %v612
    %614 = vrot.lane.b32.xlu0 %v498, 96
    %v615 = vpop.permute.xlu0 %614
    %616 = vrot.lane.b32.xlu0 %v503, 96
    %v617 = vpop.permute.xlu0 %616
    %v621 = vsel %vm602, %v613, 0
    %623 = vmatprep.subr.mxu0 0.0
    %624 = vmatpush1.msra.mxu0 %v615
    %625 = vmatprep.subr.mxu0 0.0
    %626 = vmatpush1.msra.mxu0 %v617
    %627 = vmatprep.subr.mxu0 0.0
    %628 = vmatpush1.msra.mxu0 0.0
    %629 = vmatprep.subr.mxu0 0.0
    %630 = vmatpush1.msra.mxu0 0.0
    %631 = vmatprep.subr.mxu0 0.0
    %632 = vmatpush1.msra.mxu0 0.0
    %633 = vmatprep.subr.mxu0 0.0
    %634 = vmatpush1.msra.mxu0 0.0
    %635 = vmatprep.subr.mxu0 0.0
    %636 = vmatpush1.msra.mxu0 0.0
    %637 = vmatprep.subr.mxu0 0.0
    %638 = vmatpush1.msra.mxu0 0.0
    %639 = vmatprep.subr.mxu0 0.0
    %640 = vmatpush1.msra.mxu0 0.0
    %641 = vmatprep.subr.mxu0 0.0
    %642 = vmatpush1.msra.mxu0 0.0
    %643 = vmatprep.subr.mxu0 0.0
    %644 = vmatpush1.msra.mxu0 0.0
    %645 = vmatprep.subr.mxu0 0.0
    %646 = vmatpush1.msra.mxu0 0.0
    %647 = vmatprep.subr.mxu0 0.0
    %648 = vmatpush1.msra.mxu0 0.0
    %649 = vmatprep.subr.mxu0 0.0
    %650 = vmatpush1.msra.mxu0 0.0
    %651 = vmatprep.subr.mxu0 0.0
    %652 = vmatpush1.msra.mxu0 0.0
    %653 = vmatprep.subr.mxu0 0.0
    %654 = vmatpush1.msra.mxu0 0.0
    %655 = vmatprep.subr.mxu0 0.0
    %656 = vmatpush1.msra.mxu0 0.0
    %657 = vmatprep.subr.mxu0 0.0
    %658 = vmatpush1.msra.mxu0 0.0
    %659 = vmatprep.subr.mxu0 0.0
    %660 = vmatpush1.msra.mxu0 0.0
    %661 = vmatprep.subr.mxu0 0.0
    %662 = vmatpush1.msra.mxu0 0.0
    %663 = vmatprep.subr.mxu0 0.0
    %664 = vmatpush1.msra.mxu0 0.0
    %665 = vmatprep.subr.mxu0 0.0
    %666 = vmatpush1.msra.mxu0 0.0
    %667 = vmatprep.subr.mxu0 0.0
    %668 = vmatpush1.msra.mxu0 0.0
    %669 = vmatprep.subr.mxu0 0.0
    %670 = vmatpush1.msra.mxu0 0.0
    %671 = vmatprep.subr.mxu0 0.0
    %672 = vmatpush1.msra.mxu0 0.0
    %673 = vmatprep.subr.mxu0 0.0
    %674 = vmatpush1.msra.mxu0 0.0
    %675 = vmatprep.subr.mxu0 0.0
    %676 = vmatpush1.msra.mxu0 0.0
    %677 = vmatprep.subr.mxu0 0.0
    %678 = vmatpush1.msra.mxu0 0.0
    %679 = vmatprep.subr.mxu0 0.0
    %680 = vmatpush1.msra.mxu0 0.0
    %681 = vmatprep.subr.mxu0 0.0
    %682 = vmatpush1.msra.mxu0 0.0
    %683 = vmatprep.subr.mxu0 0.0
    %684 = vmatpush1.msra.mxu0 0.0
    %685 = vmatprep.subr.mxu0 0.0
    %686 = vmatpush1.msra.mxu0 0.0
    %687 = vmatprep.mubr.f32.mxu0 0.0
    %688 = vmatmul.mubr.f32.gmra.mrb[0].mxu0 %v621
    %v689 = vpop.f32.mrb[0].mxu0
    %v690 = vadd.f32 0.0, %v689
    %v691 = vpop.f32.mrb[0].mxu0
    %692 = vdwg.mxu0
    %693 = vst.msk [vmem:[#allocation11] sm:$0xff] %vm516, %v690
    %vm694 = vcmask 261248
    %v695 = vsel %vm694, %v599, -inf
    %696 = vmax.xlane.f32.xlu0 %v695
    %v697 = vpop.xlane.xlu0 %696
    %v698 = vsub.f32 %v599, %v697
    %v699 = vmul.f32 %v698, 1.442695
    %v700 = vpow.pop %v699
    %702 = vrot.lane.b32.xlu0 %v700, 112
    %v703 = vpop.permute.xlu0 %702
    %v705 = vsel %vm602, %v703, 0.0
    %706 = vadd.xlane.f32.xlu0 %v705
    %v707 = vpop.xlane.xlu0 %706
    %v708 = vrcp.pop %v707
    %v709 = vmul.f32 %v700, %v708
    %711 = vrot.lane.b32.xlu0 %v709, 112
    %v712 = vpop.permute.xlu0 %711
    %713 = vrot.lane.b32.xlu0 %v508, 96
    %v714 = vpop.permute.xlu0 %713
    %715 = vrot.lane.b32.xlu0 %v513, 96
    %v716 = vpop.permute.xlu0 %715
    %v719 = vsel %vm602, %v712, 0
    %721 = vmatprep.subr.mxu0 0.0
    %722 = vmatpush1.msra.mxu0 %v714
    %723 = vmatprep.subr.mxu0 0.0
    %724 = vmatpush1.msra.mxu0 %v716
    %725 = vmatprep.subr.mxu0 0.0
    %726 = vmatpush1.msra.mxu0 0.0
    %727 = vmatprep.subr.mxu0 0.0
    %728 = vmatpush1.msra.mxu0 0.0
    %729 = vmatprep.subr.mxu0 0.0
    %730 = vmatpush1.msra.mxu0 0.0
    %731 = vmatprep.subr.mxu0 0.0
    %732 = vmatpush1.msra.mxu0 0.0
    %733 = vmatprep.subr.mxu0 0.0
    %734 = vmatpush1.msra.mxu0 0.0
    %735 = vmatprep.subr.mxu0 0.0
    %736 = vmatpush1.msra.mxu0 0.0
    %737 = vmatprep.subr.mxu0 0.0
    %738 = vmatpush1.msra.mxu0 0.0
    %739 = vmatprep.subr.mxu0 0.0
    %740 = vmatpush1.msra.mxu0 0.0
    %741 = vmatprep.subr.mxu0 0.0
    %742 = vmatpush1.msra.mxu0 0.0
    %743 = vmatprep.subr.mxu0 0.0
    %744 = vmatpush1.msra.mxu0 0.0
    %745 = vmatprep.subr.mxu0 0.0
    %746 = vmatpush1.msra.mxu0 0.0
    %747 = vmatprep.subr.mxu0 0.0
    %748 = vmatpush1.msra.mxu0 0.0
    %749 = vmatprep.subr.mxu0 0.0
    %750 = vmatpush1.msra.mxu0 0.0
    %751 = vmatprep.subr.mxu0 0.0
    %752 = vmatpush1.msra.mxu0 0.0
    %753 = vmatprep.subr.mxu0 0.0
    %754 = vmatpush1.msra.mxu0 0.0
    %755 = vmatprep.subr.mxu0 0.0
    %756 = vmatpush1.msra.mxu0 0.0
    %757 = vmatprep.subr.mxu0 0.0
    %758 = vmatpush1.msra.mxu0 0.0
    %759 = vmatprep.subr.mxu0 0.0
    %760 = vmatpush1.msra.mxu0 0.0
    %761 = vmatprep.subr.mxu0 0.0
    %762 = vmatpush1.msra.mxu0 0.0
    %763 = vmatprep.subr.mxu0 0.0
    %764 = vmatpush1.msra.mxu0 0.0
    %765 = vmatprep.subr.mxu0 0.0
    %766 = vmatpush1.msra.mxu0 0.0
    %767 = vmatprep.subr.mxu0 0.0
    %768 = vmatpush1.msra.mxu0 0.0
    %769 = vmatprep.subr.mxu0 0.0
    %770 = vmatpush1.msra.mxu0 0.0
    %771 = vmatprep.subr.mxu0 0.0
    %772 = vmatpush1.msra.mxu0 0.0
    %773 = vmatprep.subr.mxu0 0.0
    %774 = vmatpush1.msra.mxu0 0.0
    %775 = vmatprep.subr.mxu0 0.0
    %776 = vmatpush1.msra.mxu0 0.0
    %777 = vmatprep.subr.mxu0 0.0
    %778 = vmatpush1.msra.mxu0 0.0
    %779 = vmatprep.subr.mxu0 0.0
    %780 = vmatpush1.msra.mxu0 0.0
    %781 = vmatprep.subr.mxu0 0.0
    %782 = vmatpush1.msra.mxu0 0.0
    %783 = vmatprep.subr.mxu0 0.0
    %784 = vmatpush1.msra.mxu0 0.0
    %785 = vmatprep.mubr.f32.mxu0 0.0
    %786 = vmatmul.mubr.f32.gmra.mrb[0].mxu0 %v719
    %v787 = vpop.f32.mrb[0].mxu0
    %v788 = vadd.f32 0.0, %v787
    %v789 = vpop.f32.mrb[0].mxu0
    %790 = vdwg.mxu0
    %791 = vst.msk [vmem:[#allocation11 + $0x8] sm:$0xff] %vm516, %v788
    %792 = vrot.lane.b32.xlu0 %v405, 120
    %v793 = vpop.permute.xlu0 %792
    %794 = vrot.lane.b32.xlu0 %v498, 120
    %v795 = vpop.permute.xlu0 %794
    %796 = vrot.lane.b32.xlu0 %v503, 120
    %v797 = vpop.permute.xlu0 %796
    %798 = vrot.lane.b32.xlu0 %v508, 120
    %v799 = vpop.permute.xlu0 %798
    %800 = vrot.lane.b32.xlu0 %v513, 120
    %v801 = vpop.permute.xlu0 %800
    %v802 = vsel %vm516, %v793, 0
    %v804 = vsel %vm516, %v795, 0
    %v806 = vsel %vm516, %v797, 0
    %v808 = vsel %vm516, %v799, 0
    %v810 = vsel %vm516, %v801, 0
    %812 = vmatprep.subr.mxu0 0.0
    %813 = vmatpush1.xpose.msra.mxu0 %v804
    %814 = vmatprep.subr.mxu0 0.0
    %815 = vmatpush1.xpose.msra.mxu0 %v806
    %816 = vmatprep.subr.mxu0 0.0
    %817 = vmatpush1.xpose.msra.mxu0 %v808
    %818 = vmatprep.subr.mxu0 0.0
    %819 = vmatpush1.xpose.msra.mxu0 %v810
    %820 = vmatprep.subr.mxu0 0.0
    %821 = vmatpush1.xpose.msra.mxu0 0.0
    %822 = vmatprep.subr.mxu0 0.0
    %823 = vmatpush1.xpose.msra.mxu0 0.0
    %824 = vmatprep.subr.mxu0 0.0
    %825 = vmatpush1.xpose.msra.mxu0 0.0
    %826 = vmatprep.subr.mxu0 0.0
    %827 = vmatpush1.xpose.msra.mxu0 0.0
    %828 = vmatprep.subr.mxu0 0.0
    %829 = vmatpush1.xpose.msra.mxu0 0.0
    %830 = vmatprep.subr.mxu0 0.0
    %831 = vmatpush1.xpose.msra.mxu0 0.0
    %832 = vmatprep.subr.mxu0 0.0
    %833 = vmatpush1.xpose.msra.mxu0 0.0
    %834 = vmatprep.subr.mxu0 0.0
    %835 = vmatpush1.xpose.msra.mxu0 0.0
    %836 = vmatprep.subr.mxu0 0.0
    %837 = vmatpush1.xpose.msra.mxu0 0.0
    %838 = vmatprep.subr.mxu0 0.0
    %839 = vmatpush1.xpose.msra.mxu0 0.0
    %840 = vmatprep.subr.mxu0 0.0
    %841 = vmatpush1.xpose.msra.mxu0 0.0
    %842 = vmatprep.subr.mxu0 0.0
    %843 = vmatpush1.xpose.msra.mxu0 0.0
    %844 = vmatprep.subr.mxu0 0.0
    %845 = vmatpush1.xpose.msra.mxu0 0.0
    %846 = vmatprep.subr.mxu0 0.0
    %847 = vmatpush1.xpose.msra.mxu0 0.0
    %848 = vmatprep.subr.mxu0 0.0
    %849 = vmatpush1.xpose.msra.mxu0 0.0
    %850 = vmatprep.subr.mxu0 0.0
    %851 = vmatpush1.xpose.msra.mxu0 0.0
    %852 = vmatprep.subr.mxu0 0.0
    %853 = vmatpush1.xpose.msra.mxu0 0.0
    %854 = vmatprep.subr.mxu0 0.0
    %855 = vmatpush1.xpose.msra.mxu0 0.0
    %856 = vmatprep.subr.mxu0 0.0
    %857 = vmatpush1.xpose.msra.mxu0 0.0
    %858 = vmatprep.subr.mxu0 0.0
    %859 = vmatpush1.xpose.msra.mxu0 0.0
    %860 = vmatprep.subr.mxu0 0.0
    %861 = vmatpush1.xpose.msra.mxu0 0.0
    %862 = vmatprep.subr.mxu0 0.0
    %863 = vmatpush1.xpose.msra.mxu0 0.0
    %864 = vmatprep.subr.mxu0 0.0
    %865 = vmatpush1.xpose.msra.mxu0 0.0
    %866 = vmatprep.subr.mxu0 0.0
    %867 = vmatpush1.xpose.msra.mxu0 0.0
    %868 = vmatprep.subr.mxu0 0.0
    %869 = vmatpush1.xpose.msra.mxu0 0.0
    %870 = vmatprep.subr.mxu0 0.0
    %871 = vmatpush1.xpose.msra.mxu0 0.0
    %872 = vmatprep.subr.mxu0 0.0
    %873 = vmatpush1.xpose.msra.mxu0 0.0
    %874 = vmatprep.subr.mxu0 0.0
    %875 = vmatpush1.xpose.msra.mxu0 0.0
    %876 = vmatprep.mubr.f32.mxu0 0.0
    %877 = vmatmul.mubr.f32.gmra.mrb[0].mxu0 %v802
    %v878 = vpop.f32.mrb[0].mxu0
    %v879 = vadd.f32 0.0, %v878
    %v880 = vpop.f32.mrb[0].mxu0
    %881 = vdwg.mxu0
    %v882 = vsel %vm602, %v879, -inf
    %883 = vmax.xlane.f32.xlu0 %v882
    %v884 = vpop.xlane.xlu0 %883
    %v885 = vsub.f32 %v879, %v884
    %v886 = vmul.f32 %v885, 1.442695
    %v887 = vpow.pop %v886
    %v888 = vsel %vm602, %v887, 0.0
    %889 = vadd.xlane.f32.xlu0 %v888
    %v890 = vpop.xlane.xlu0 %889
    %v891 = vrcp.pop %v890
    %v892 = vmul.f32 %v887, %v891
    %893 = vrot.lane.b32.xlu0 %v498, 88
    %v894 = vpop.permute.xlu0 %893
    %895 = vrot.lane.b32.xlu0 %v503, 88
    %v896 = vpop.permute.xlu0 %895
    %v900 = vsel %vm602, %v892, 0
    %902 = vmatprep.subr.mxu0 0.0
    %903 = vmatpush1.msra.mxu0 %v894
    %904 = vmatprep.subr.mxu0 0.0
    %905 = vmatpush1.msra.mxu0 %v896
    %906 = vmatprep.subr.mxu0 0.0
    %907 = vmatpush1.msra.mxu0 0.0
    %908 = vmatprep.subr.mxu0 0.0
    %909 = vmatpush1.msra.mxu0 0.0
    %910 = vmatprep.subr.mxu0 0.0
    %911 = vmatpush1.msra.mxu0 0.0
    %912 = vmatprep.subr.mxu0 0.0
    %913 = vmatpush1.msra.mxu0 0.0
    %914 = vmatprep.subr.mxu0 0.0
    %915 = vmatpush1.msra.mxu0 0.0
    %916 = vmatprep.subr.mxu0 0.0
    %917 = vmatpush1.msra.mxu0 0.0
    %918 = vmatprep.subr.mxu0 0.0
    %919 = vmatpush1.msra.mxu0 0.0
    %920 = vmatprep.subr.mxu0 0.0
    %921 = vmatpush1.msra.mxu0 0.0
    %922 = vmatprep.subr.mxu0 0.0
    %923 = vmatpush1.msra.mxu0 0.0
    %924 = vmatprep.subr.mxu0 0.0
    %925 = vmatpush1.msra.mxu0 0.0
    %926 = vmatprep.subr.mxu0 0.0
    %927 = vmatpush1.msra.mxu0 0.0
    %928 = vmatprep.subr.mxu0 0.0
    %929 = vmatpush1.msra.mxu0 0.0
    %930 = vmatprep.subr.mxu0 0.0
    %931 = vmatpush1.msra.mxu0 0.0
    %932 = vmatprep.subr.mxu0 0.0
    %933 = vmatpush1.msra.mxu0 0.0
    %934 = vmatprep.subr.mxu0 0.0
    %935 = vmatpush1.msra.mxu0 0.0
    %936 = vmatprep.subr.mxu0 0.0
    %937 = vmatpush1.msra.mxu0 0.0
    %938 = vmatprep.subr.mxu0 0.0
    %939 = vmatpush1.msra.mxu0 0.0
    %940 = vmatprep.subr.mxu0 0.0
    %941 = vmatpush1.msra.mxu0 0.0
    %942 = vmatprep.subr.mxu0 0.0
    %943 = vmatpush1.msra.mxu0 0.0
    %944 = vmatprep.subr.mxu0 0.0
    %945 = vmatpush1.msra.mxu0 0.0
    %946 = vmatprep.subr.mxu0 0.0
    %947 = vmatpush1.msra.mxu0 0.0
    %948 = vmatprep.subr.mxu0 0.0
    %949 = vmatpush1.msra.mxu0 0.0
    %950 = vmatprep.subr.mxu0 0.0
    %951 = vmatpush1.msra.mxu0 0.0
    %952 = vmatprep.subr.mxu0 0.0
    %953 = vmatpush1.msra.mxu0 0.0
    %954 = vmatprep.subr.mxu0 0.0
    %955 = vmatpush1.msra.mxu0 0.0
    %956 = vmatprep.subr.mxu0 0.0
    %957 = vmatpush1.msra.mxu0 0.0
    %958 = vmatprep.subr.mxu0 0.0
    %959 = vmatpush1.msra.mxu0 0.0
    %960 = vmatprep.subr.mxu0 0.0
    %961 = vmatpush1.msra.mxu0 0.0
    %962 = vmatprep.subr.mxu0 0.0
    %963 = vmatpush1.msra.mxu0 0.0
    %964 = vmatprep.subr.mxu0 0.0
    %965 = vmatpush1.msra.mxu0 0.0
    %966 = vmatprep.mubr.f32.mxu0 0.0
    %967 = vmatmul.mubr.f32.gmra.mrb[0].mxu0 %v900
    %v968 = vpop.f32.mrb[0].mxu0
    %v969 = vadd.f32 0.0, %v968
    %v970 = vpop.f32.mrb[0].mxu0
    %971 = vdwg.mxu0
    %973 = vrot.lane.b32.xlu0 %v969, 8
    %v974 = vpop.permute.xlu0 %973
    %vm976 = vcmask 130112
    %977 = vst.msk [vmem:[#allocation11] sm:$0xff] %vm976, %v974
    %v978 = vsel %vm694, %v879, -inf
    %979 = vmax.xlane.f32.xlu0 %v978
    %v980 = vpop.xlane.xlu0 %979
    %v981 = vsub.f32 %v879, %v980
    %v982 = vmul.f32 %v981, 1.442695
    %v983 = vpow.pop %v982
    %985 = vrot.lane.b32.xlu0 %v983, 112
    %v986 = vpop.permute.xlu0 %985
    %v988 = vsel %vm602, %v986, 0.0
    %989 = vadd.xlane.f32.xlu0 %v988
    %v990 = vpop.xlane.xlu0 %989
    %v991 = vrcp.pop %v990
    %v992 = vmul.f32 %v983, %v991
    %994 = vrot.lane.b32.xlu0 %v992, 112
    %v995 = vpop.permute.xlu0 %994
    %996 = vrot.lane.b32.xlu0 %v508, 88
    %v997 = vpop.permute.xlu0 %996
    %998 = vrot.lane.b32.xlu0 %v513, 88
    %v999 = vpop.permute.xlu0 %998
    %v1002 = vsel %vm602, %v995, 0
    %1004 = vmatprep.subr.mxu0 0.0
    %1005 = vmatpush1.msra.mxu0 %v997
    %1006 = vmatprep.subr.mxu0 0.0
    %1007 = vmatpush1.msra.mxu0 %v999
    %1008 = vmatprep.subr.mxu0 0.0
    %1009 = vmatpush1.msra.mxu0 0.0
    %1010 = vmatprep.subr.mxu0 0.0
    %1011 = vmatpush1.msra.mxu0 0.0
    %1012 = vmatprep.subr.mxu0 0.0
    %1013 = vmatpush1.msra.mxu0 0.0
    %1014 = vmatprep.subr.mxu0 0.0
    %1015 = vmatpush1.msra.mxu0 0.0
    %1016 = vmatprep.subr.mxu0 0.0
    %1017 = vmatpush1.msra.mxu0 0.0
    %1018 = vmatprep.subr.mxu0 0.0
    %1019 = vmatpush1.msra.mxu0 0.0
    %1020 = vmatprep.subr.mxu0 0.0
    %1021 = vmatpush1.msra.mxu0 0.0
    %1022 = vmatprep.subr.mxu0 0.0
    %1023 = vmatpush1.msra.mxu0 0.0
    %1024 = vmatprep.subr.mxu0 0.0
    %1025 = vmatpush1.msra.mxu0 0.0
    %1026 = vmatprep.subr.mxu0 0.0
    %1027 = vmatpush1.msra.mxu0 0.0
    %1028 = vmatprep.subr.mxu0 0.0
    %1029 = vmatpush1.msra.mxu0 0.0
    %1030 = vmatprep.subr.mxu0 0.0
    %1031 = vmatpush1.msra.mxu0 0.0
    %1032 = vmatprep.subr.mxu0 0.0
    %1033 = vmatpush1.msra.mxu0 0.0
    %1034 = vmatprep.subr.mxu0 0.0
    %1035 = vmatpush1.msra.mxu0 0.0
    %1036 = vmatprep.subr.mxu0 0.0
    %1037 = vmatpush1.msra.mxu0 0.0
    %1038 = vmatprep.subr.mxu0 0.0
    %1039 = vmatpush1.msra.mxu0 0.0
    %1040 = vmatprep.subr.mxu0 0.0
    %1041 = vmatpush1.msra.mxu0 0.0
    %1042 = vmatprep.subr.mxu0 0.0
    %1043 = vmatpush1.msra.mxu0 0.0
    %1044 = vmatprep.subr.mxu0 0.0
    %1045 = vmatpush1.msra.mxu0 0.0
    %1046 = vmatprep.subr.mxu0 0.0
    %1047 = vmatpush1.msra.mxu0 0.0
    %1048 = vmatprep.subr.mxu0 0.0
    %1049 = vmatpush1.msra.mxu0 0.0
    %1050 = vmatprep.subr.mxu0 0.0
    %1051 = vmatpush1.msra.mxu0 0.0
    %1052 = vmatprep.subr.mxu0 0.0
    %1053 = vmatpush1.msra.mxu0 0.0
    %1054 = vmatprep.subr.mxu0 0.0
    %1055 = vmatpush1.msra.mxu0 0.0
    %1056 = vmatprep.subr.mxu0 0.0
    %1057 = vmatpush1.msra.mxu0 0.0
    %1058 = vmatprep.subr.mxu0 0.0
    %1059 = vmatpush1.msra.mxu0 0.0
    %1060 = vmatprep.subr.mxu0 0.0
    %1061 = vmatpush1.msra.mxu0 0.0
    %1062 = vmatprep.subr.mxu0 0.0
    %1063 = vmatpush1.msra.mxu0 0.0
    %1064 = vmatprep.subr.mxu0 0.0
    %1065 = vmatpush1.msra.mxu0 0.0
    %1066 = vmatprep.subr.mxu0 0.0
    %1067 = vmatpush1.msra.mxu0 0.0
    %1068 = vmatprep.mubr.f32.mxu0 0.0
    %1069 = vmatmul.mubr.f32.gmra.mrb[0].mxu0 %v1002
    %v1070 = vpop.f32.mrb[0].mxu0
    %v1071 = vadd.f32 0.0, %v1070
    %v1072 = vpop.f32.mrb[0].mxu0
    %1073 = vdwg.mxu0
    %1075 = vrot.lane.b32.xlu0 %v1071, 8
    %v1076 = vpop.permute.xlu0 %1075
    %1078 = vst.msk [vmem:[#allocation11 + $0x8] sm:$0xff] %vm976, %v1076
    %1079 = vrot.lane.b32.xlu0 %v405, 112
    %v1080 = vpop.permute.xlu0 %1079
    %1081 = vrot.lane.b32.xlu0 %v498, 112
    %v1082 = vpop.permute.xlu0 %1081
    %1083 = vrot.lane.b32.xlu0 %v503, 112
    %v1084 = vpop.permute.xlu0 %1083
    %1085 = vrot.lane.b32.xlu0 %v508, 112
    %v1086 = vpop.permute.xlu0 %1085
    %1087 = vrot.lane.b32.xlu0 %v513, 112
    %v1088 = vpop.permute.xlu0 %1087
    %v1089 = vsel %vm516, %v1080, 0
    %v1091 = vsel %vm516, %v1082, 0
    %v1093 = vsel %vm516, %v1084, 0
    %v1095 = vsel %vm516, %v1086, 0
    %v1097 = vsel %vm516, %v1088, 0
    %1099 = vmatprep.subr.mxu0 0.0
    %1100 = vmatpush1.xpose.msra.mxu0 %v1091
    %1101 = vmatprep.subr.mxu0 0.0
    %1102 = vmatpush1.xpose.msra.mxu0 %v1093
    %1103 = vmatprep.subr.mxu0 0.0
    %1104 = vmatpush1.xpose.msra.mxu0 %v1095
    %1105 = vmatprep.subr.mxu0 0.0
    %1106 = vmatpush1.xpose.msra.mxu0 %v1097
    %1107 = vmatprep.subr.mxu0 0.0
    %1108 = vmatpush1.xpose.msra.mxu0 0.0
    %1109 = vmatprep.subr.mxu0 0.0
    %1110 = vmatpush1.xpose.msra.mxu0 0.0
    %1111 = vmatprep.subr.mxu0 0.0
    %1112 = vmatpush1.xpose.msra.mxu0 0.0
    %1113 = vmatprep.subr.mxu0 0.0
    %1114 = vmatpush1.xpose.msra.mxu0 0.0
    %1115 = vmatprep.subr.mxu0 0.0
    %1116 = vmatpush1.xpose.msra.mxu0 0.0
    %1117 = vmatprep.subr.mxu0 0.0
    %1118 = vmatpush1.xpose.msra.mxu0 0.0
    %1119 = vmatprep.subr.mxu0 0.0
    %1120 = vmatpush1.xpose.msra.mxu0 0.0
    %1121 = vmatprep.subr.mxu0 0.0
    %1122 = vmatpush1.xpose.msra.mxu0 0.0
    %1123 = vmatprep.subr.mxu0 0.0
    %1124 = vmatpush1.xpose.msra.mxu0 0.0
    %1125 = vmatprep.subr.mxu0 0.0
    %1126 = vmatpush1.xpose.msra.mxu0 0.0
    %1127 = vmatprep.subr.mxu0 0.0
    %1128 = vmatpush1.xpose.msra.mxu0 0.0
    %1129 = vmatprep.subr.mxu0 0.0
    %1130 = vmatpush1.xpose.msra.mxu0 0.0
    %1131 = vmatprep.subr.mxu0 0.0
    %1132 = vmatpush1.xpose.msra.mxu0 0.0
    %1133 = vmatprep.subr.mxu0 0.0
    %1134 = vmatpush1.xpose.msra.mxu0 0.0
    %1135 = vmatprep.subr.mxu0 0.0
    %1136 = vmatpush1.xpose.msra.mxu0 0.0
    %1137 = vmatprep.subr.mxu0 0.0
    %1138 = vmatpush1.xpose.msra.mxu0 0.0
    %1139 = vmatprep.subr.mxu0 0.0
    %1140 = vmatpush1.xpose.msra.mxu0 0.0
    %1141 = vmatprep.subr.mxu0 0.0
    %1142 = vmatpush1.xpose.msra.mxu0 0.0
    %1143 = vmatprep.subr.mxu0 0.0
    %1144 = vmatpush1.xpose.msra.mxu0 0.0
    %1145 = vmatprep.subr.mxu0 0.0
    %1146 = vmatpush1.xpose.msra.mxu0 0.0
    %1147 = vmatprep.subr.mxu0 0.0
    %1148 = vmatpush1.xpose.msra.mxu0 0.0
    %1149 = vmatprep.subr.mxu0 0.0
    %1150 = vmatpush1.xpose.msra.mxu0 0.0
    %1151 = vmatprep.subr.mxu0 0.0
    %1152 = vmatpush1.xpose.msra.mxu0 0.0
    %1153 = vmatprep.subr.mxu0 0.0
    %1154 = vmatpush1.xpose.msra.mxu0 0.0
    %1155 = vmatprep.subr.mxu0 0.0
    %1156 = vmatpush1.xpose.msra.mxu0 0.0
    %1157 = vmatprep.subr.mxu0 0.0
    %1158 = vmatpush1.xpose.msra.mxu0 0.0
    %1159 = vmatprep.subr.mxu0 0.0
    %1160 = vmatpush1.xpose.msra.mxu0 0.0
    %1161 = vmatprep.subr.mxu0 0.0
    %1162 = vmatpush1.xpose.msra.mxu0 0.0
    %1163 = vmatprep.mubr.f32.mxu0 0.0
    %1164 = vmatmul.mubr.f32.gmra.mrb[0].mxu0 %v1089
    %v1165 = vpop.f32.mrb[0].mxu0
    %v1166 = vadd.f32 0.0, %v1165
    %v1167 = vpop.f32.mrb[0].mxu0
    %1168 = vdwg.mxu0
    %v1169 = vsel %vm602, %v1166, -inf
    %1170 = vmax.xlane.f32.xlu0 %v1169
    %v1171 = vpop.xlane.xlu0 %1170
    %v1172 = vsub.f32 %v1166, %v1171
    %v1173 = vmul.f32 %v1172, 1.442695
    %v1174 = vpow.pop %v1173
    %v1175 = vsel %vm602, %v1174, 0.0
    %1176 = vadd.xlane.f32.xlu0 %v1175
    %v1177 = vpop.xlane.xlu0 %1176
    %v1178 = vrcp.pop %v1177
    %v1179 = vmul.f32 %v1174, %v1178
    %1180 = vrot.lane.b32.xlu0 %v498, 80
    %v1181 = vpop.permute.xlu0 %1180
    %1182 = vrot.lane.b32.xlu0 %v503, 80
    %v1183 = vpop.permute.xlu0 %1182
    %v1187 = vsel %vm602, %v1179, 0
    %1189 = vmatprep.subr.mxu0 0.0
    %1190 = vmatpush1.msra.mxu0 %v1181
    %1191 = vmatprep.subr.mxu0 0.0
    %1192 = vmatpush1.msra.mxu0 %v1183
    %1193 = vmatprep.subr.mxu0 0.0
    %1194 = vmatpush1.msra.mxu0 0.0
    %1195 = vmatprep.subr.mxu0 0.0
    %1196 = vmatpush1.msra.mxu0 0.0
    %1197 = vmatprep.subr.mxu0 0.0
    %1198 = vmatpush1.msra.mxu0 0.0
    %1199 = vmatprep.subr.mxu0 0.0
    %1200 = vmatpush1.msra.mxu0 0.0
    %1201 = vmatprep.subr.mxu0 0.0
    %1202 = vmatpush1.msra.mxu0 0.0
    %1203 = vmatprep.subr.mxu0 0.0
    %1204 = vmatpush1.msra.mxu0 0.0
    %1205 = vmatprep.subr.mxu0 0.0
    %1206 = vmatpush1.msra.mxu0 0.0
    %1207 = vmatprep.subr.mxu0 0.0
    %1208 = vmatpush1.msra.mxu0 0.0
    %1209 = vmatprep.subr.mxu0 0.0
    %1210 = vmatpush1.msra.mxu0 0.0
    %1211 = vmatprep.subr.mxu0 0.0
    %1212 = vmatpush1.msra.mxu0 0.0
    %1213 = vmatprep.subr.mxu0 0.0
    %1214 = vmatpush1.msra.mxu0 0.0
    %1215 = vmatprep.subr.mxu0 0.0
    %1216 = vmatpush1.msra.mxu0 0.0
    %1217 = vmatprep.subr.mxu0 0.0
    %1218 = vmatpush1.msra.mxu0 0.0
    %1219 = vmatprep.subr.mxu0 0.0
    %1220 = vmatpush1.msra.mxu0 0.0
    %1221 = vmatprep.subr.mxu0 0.0
    %1222 = vmatpush1.msra.mxu0 0.0
    %1223 = vmatprep.subr.mxu0 0.0
    %1224 = vmatpush1.msra.mxu0 0.0
    %1225 = vmatprep.subr.mxu0 0.0
    %1226 = vmatpush1.msra.mxu0 0.0
    %1227 = vmatprep.subr.mxu0 0.0
    %1228 = vmatpush1.msra.mxu0 0.0
    %1229 = vmatprep.subr.mxu0 0.0
    %1230 = vmatpush1.msra.mxu0 0.0
    %1231 = vmatprep.subr.mxu0 0.0
    %1232 = vmatpush1.msra.mxu0 0.0
    %1233 = vmatprep.subr.mxu0 0.0
    %1234 = vmatpush1.msra.mxu0 0.0
    %1235 = vmatprep.subr.mxu0 0.0
    %1236 = vmatpush1.msra.mxu0 0.0
    %1237 = vmatprep.subr.mxu0 0.0
    %1238 = vmatpush1.msra.mxu0 0.0
    %1239 = vmatprep.subr.mxu0 0.0
    %1240 = vmatpush1.msra.mxu0 0.0
    %1241 = vmatprep.subr.mxu0 0.0
    %1242 = vmatpush1.msra.mxu0 0.0
    %1243 = vmatprep.subr.mxu0 0.0
    %1244 = vmatpush1.msra.mxu0 0.0
    %1245 = vmatprep.subr.mxu0 0.0
    %1246 = vmatpush1.msra.mxu0 0.0
    %1247 = vmatprep.subr.mxu0 0.0
    %1248 = vmatpush1.msra.mxu0 0.0
    %1249 = vmatprep.subr.mxu0 0.0
    %1250 = vmatpush1.msra.mxu0 0.0
    %1251 = vmatprep.subr.mxu0 0.0
    %1252 = vmatpush1.msra.mxu0 0.0
    %1253 = vmatprep.mubr.f32.mxu0 0.0
    %1254 = vmatmul.mubr.f32.gmra.mrb[0].mxu0 %v1187
    %v1255 = vpop.f32.mrb[0].mxu0
    %v1256 = vadd.f32 0.0, %v1255
    %v1257 = vpop.f32.mrb[0].mxu0
    %1258 = vdwg.mxu0
    %1260 = vrot.lane.b32.xlu0 %v1256, 16
    %v1261 = vpop.permute.xlu0 %1260
    %vm1263 = vcmask 195712
    %1264 = vst.msk [vmem:[#allocation11] sm:$0xff] %vm1263, %v1261
    %v1265 = vsel %vm694, %v1166, -inf
    %1266 = vmax.xlane.f32.xlu0 %v1265
    %v1267 = vpop.xlane.xlu0 %1266
    %v1268 = vsub.f32 %v1166, %v1267
    %v1269 = vmul.f32 %v1268, 1.442695
    %v1270 = vpow.pop %v1269
    %1272 = vrot.lane.b32.xlu0 %v1270, 112
    %v1273 = vpop.permute.xlu0 %1272
    %v1275 = vsel %vm602, %v1273, 0.0
    %1276 = vadd.xlane.f32.xlu0 %v1275
    %v1277 = vpop.xlane.xlu0 %1276
    %v1278 = vrcp.pop %v1277
    %v1279 = vmul.f32 %v1270, %v1278
    %1281 = vrot.lane.b32.xlu0 %v1279, 112
    %v1282 = vpop.permute.xlu0 %1281
    %1283 = vrot.lane.b32.xlu0 %v508, 80
    %v1284 = vpop.permute.xlu0 %1283
    %1285 = vrot.lane.b32.xlu0 %v513, 80
    %v1286 = vpop.permute.xlu0 %1285
    %v1289 = vsel %vm602, %v1282, 0
    %1291 = vmatprep.subr.mxu0 0.0
    %1292 = vmatpush1.msra.mxu0 %v1284
    %1293 = vmatprep.subr.mxu0 0.0
    %1294 = vmatpush1.msra.mxu0 %v1286
    %1295 = vmatprep.subr.mxu0 0.0
    %1296 = vmatpush1.msra.mxu0 0.0
    %1297 = vmatprep.subr.mxu0 0.0
    %1298 = vmatpush1.msra.mxu0 0.0
    %1299 = vmatprep.subr.mxu0 0.0
    %1300 = vmatpush1.msra.mxu0 0.0
    %1301 = vmatprep.subr.mxu0 0.0
    %1302 = vmatpush1.msra.mxu0 0.0
    %1303 = vmatprep.subr.mxu0 0.0
    %1304 = vmatpush1.msra.mxu0 0.0
    %1305 = vmatprep.subr.mxu0 0.0
    %1306 = vmatpush1.msra.mxu0 0.0
    %1307 = vmatprep.subr.mxu0 0.0
    %1308 = vmatpush1.msra.mxu0 0.0
    %1309 = vmatprep.subr.mxu0 0.0
    %1310 = vmatpush1.msra.mxu0 0.0
    %1311 = vmatprep.subr.mxu0 0.0
    %1312 = vmatpush1.msra.mxu0 0.0
    %1313 = vmatprep.subr.mxu0 0.0
    %1314 = vmatpush1.msra.mxu0 0.0
    %1315 = vmatprep.subr.mxu0 0.0
    %1316 = vmatpush1.msra.mxu0 0.0
    %1317 = vmatprep.subr.mxu0 0.0
    %1318 = vmatpush1.msra.mxu0 0.0
    %1319 = vmatprep.subr.mxu0 0.0
    %1320 = vmatpush1.msra.mxu0 0.0
    %1321 = vmatprep.subr.mxu0 0.0
    %1322 = vmatpush1.msra.mxu0 0.0
    %1323 = vmatprep.subr.mxu0 0.0
    %1324 = vmatpush1.msra.mxu0 0.0
    %1325 = vmatprep.subr.mxu0 0.0
    %1326 = vmatpush1.msra.mxu0 0.0
    %1327 = vmatprep.subr.mxu0 0.0
    %1328 = vmatpush1.msra.mxu0 0.0
    %1329 = vmatprep.subr.mxu0 0.0
    %1330 = vmatpush1.msra.mxu0 0.0
    %1331 = vmatprep.subr.mxu0 0.0
    %1332 = vmatpush1.msra.mxu0 0.0
    %1333 = vmatprep.subr.mxu0 0.0
    %1334 = vmatpush1.msra.mxu0 0.0
    %1335 = vmatprep.subr.mxu0 0.0
    %1336 = vmatpush1.msra.mxu0 0.0
    %1337 = vmatprep.subr.mxu0 0.0
    %1338 = vmatpush1.msra.mxu0 0.0
    %1339 = vmatprep.subr.mxu0 0.0
    %1340 = vmatpush1.msra.mxu0 0.0
    %1341 = vmatprep.subr.mxu0 0.0
    %1342 = vmatpush1.msra.mxu0 0.0
    %1343 = vmatprep.subr.mxu0 0.0
    %1344 = vmatpush1.msra.mxu0 0.0
    %1345 = vmatprep.subr.mxu0 0.0
    %1346 = vmatpush1.msra.mxu0 0.0
    %1347 = vmatprep.subr.mxu0 0.0
    %1348 = vmatpush1.msra.mxu0 0.0
    %1349 = vmatprep.subr.mxu0 0.0
    %1350 = vmatpush1.msra.mxu0 0.0
    %1351 = vmatprep.subr.mxu0 0.0
    %1352 = vmatpush1.msra.mxu0 0.0
    %1353 = vmatprep.subr.mxu0 0.0
    %1354 = vmatpush1.msra.mxu0 0.0
    %1355 = vmatprep.mubr.f32.mxu0 0.0
    %1356 = vmatmul.mubr.f32.gmra.mrb[0].mxu0 %v1289
    %v1357 = vpop.f32.mrb[0].mxu0
    %v1358 = vadd.f32 0.0, %v1357
    %v1359 = vpop.f32.mrb[0].mxu0
    %1360 = vdwg.mxu0
    %1362 = vrot.lane.b32.xlu0 %v1358, 16
    %v1363 = vpop.permute.xlu0 %1362
    %1365 = vst.msk [vmem:[#allocation11 + $0x8] sm:$0xff] %vm1263, %v1363
    %1366 = vrot.lane.b32.xlu0 %v405, 104
    %v1367 = vpop.permute.xlu0 %1366
    %1368 = vrot.lane.b32.xlu0 %v498, 104
    %v1369 = vpop.permute.xlu0 %1368
    %1370 = vrot.lane.b32.xlu0 %v503, 104
    %v1371 = vpop.permute.xlu0 %1370
    %1372 = vrot.lane.b32.xlu0 %v508, 104
    %v1373 = vpop.permute.xlu0 %1372
    %1374 = vrot.lane.b32.xlu0 %v513, 104
    %v1375 = vpop.permute.xlu0 %1374
    %v1376 = vsel %vm516, %v1367, 0
    %v1378 = vsel %vm516, %v1369, 0
    %v1380 = vsel %vm516, %v1371, 0
    %v1382 = vsel %vm516, %v1373, 0
    %v1384 = vsel %vm516, %v1375, 0
    %1386 = vmatprep.subr.mxu0 0.0
    %1387 = vmatpush1.xpose.msra.mxu0 %v1378
    %1388 = vmatprep.subr.mxu0 0.0
    %1389 = vmatpush1.xpose.msra.mxu0 %v1380
    %1390 = vmatprep.subr.mxu0 0.0
    %1391 = vmatpush1.xpose.msra.mxu0 %v1382
    %1392 = vmatprep.subr.mxu0 0.0
    %1393 = vmatpush1.xpose.msra.mxu0 %v1384
    %1394 = vmatprep.subr.mxu0 0.0
    %1395 = vmatpush1.xpose.msra.mxu0 0.0
    %1396 = vmatprep.subr.mxu0 0.0
    %1397 = vmatpush1.xpose.msra.mxu0 0.0
    %1398 = vmatprep.subr.mxu0 0.0
    %1399 = vmatpush1.xpose.msra.mxu0 0.0
    %1400 = vmatprep.subr.mxu0 0.0
    %1401 = vmatpush1.xpose.msra.mxu0 0.0
    %1402 = vmatprep.subr.mxu0 0.0
    %1403 = vmatpush1.xpose.msra.mxu0 0.0
    %1404 = vmatprep.subr.mxu0 0.0
    %1405 = vmatpush1.xpose.msra.mxu0 0.0
    %1406 = vmatprep.subr.mxu0 0.0
    %1407 = vmatpush1.xpose.msra.mxu0 0.0
    %1408 = vmatprep.subr.mxu0 0.0
    %1409 = vmatpush1.xpose.msra.mxu0 0.0
    %1410 = vmatprep.subr.mxu0 0.0
    %1411 = vmatpush1.xpose.msra.mxu0 0.0
    %1412 = vmatprep.subr.mxu0 0.0
    %1413 = vmatpush1.xpose.msra.mxu0 0.0
    %1414 = vmatprep.subr.mxu0 0.0
    %1415 = vmatpush1.xpose.msra.mxu0 0.0
    %1416 = vmatprep.subr.mxu0 0.0
    %1417 = vmatpush1.xpose.msra.mxu0 0.0
    %1418 = vmatprep.subr.mxu0 0.0
    %1419 = vmatpush1.xpose.msra.mxu0 0.0
    %1420 = vmatprep.subr.mxu0 0.0
    %1421 = vmatpush1.xpose.msra.mxu0 0.0
    %1422 = vmatprep.subr.mxu0 0.0
    %1423 = vmatpush1.xpose.msra.mxu0 0.0
    %1424 = vmatprep.subr.mxu0 0.0
    %1425 = vmatpush1.xpose.msra.mxu0 0.0
    %1426 = vmatprep.subr.mxu0 0.0
    %1427 = vmatpush1.xpose.msra.mxu0 0.0
    %1428 = vmatprep.subr.mxu0 0.0
    %1429 = vmatpush1.xpose.msra.mxu0 0.0
    %1430 = vmatprep.subr.mxu0 0.0
    %1431 = vmatpush1.xpose.msra.mxu0 0.0
    %1432 = vmatprep.subr.mxu0 0.0
    %1433 = vmatpush1.xpose.msra.mxu0 0.0
    %1434 = vmatprep.subr.mxu0 0.0
    %1435 = vmatpush1.xpose.msra.mxu0 0.0
    %1436 = vmatprep.subr.mxu0 0.0
    %1437 = vmatpush1.xpose.msra.mxu0 0.0
    %1438 = vmatprep.subr.mxu0 0.0
    %1439 = vmatpush1.xpose.msra.mxu0 0.0
    %1440 = vmatprep.subr.mxu0 0.0
    %1441 = vmatpush1.xpose.msra.mxu0 0.0
    %1442 = vmatprep.subr.mxu0 0.0
    %1443 = vmatpush1.xpose.msra.mxu0 0.0
    %1444 = vmatprep.subr.mxu0 0.0
    %1445 = vmatpush1.xpose.msra.mxu0 0.0
    %1446 = vmatprep.subr.mxu0 0.0
    %1447 = vmatpush1.xpose.msra.mxu0 0.0
    %1448 = vmatprep.subr.mxu0 0.0
    %1449 = vmatpush1.xpose.msra.mxu0 0.0
    %1450 = vmatprep.mubr.f32.mxu0 0.0
    %1451 = vmatmul.mubr.f32.gmra.mrb[0].mxu0 %v1376
    %v1452 = vpop.f32.mrb[0].mxu0
    %v1453 = vadd.f32 0.0, %v1452
    %v1454 = vpop.f32.mrb[0].mxu0
    %1455 = vdwg.mxu0
    %v1456 = vsel %vm602, %v1453, -inf
    %1457 = vmax.xlane.f32.xlu0 %v1456
    %v1458 = vpop.xlane.xlu0 %1457
    %v1459 = vsub.f32 %v1453, %v1458
    %v1460 = vmul.f32 %v1459, 1.442695
    %v1461 = vpow.pop %v1460
    %v1462 = vsel %vm602, %v1461, 0.0
    %1463 = vadd.xlane.f32.xlu0 %v1462
    %v1464 = vpop.xlane.xlu0 %1463
    %v1465 = vrcp.pop %v1464
    %v1466 = vmul.f32 %v1461, %v1465
    %1467 = vrot.lane.b32.xlu0 %v498, 72
    %v1468 = vpop.permute.xlu0 %1467
    %1469 = vrot.lane.b32.xlu0 %v503, 72
    %v1470 = vpop.permute.xlu0 %1469
    %v1474 = vsel %vm602, %v1466, 0
    %1476 = vmatprep.subr.mxu0 0.0
    %1477 = vmatpush1.msra.mxu0 %v1468
    %1478 = vmatprep.subr.mxu0 0.0
    %1479 = vmatpush1.msra.mxu0 %v1470
    %1480 = vmatprep.subr.mxu0 0.0
    %1481 = vmatpush1.msra.mxu0 0.0
    %1482 = vmatprep.subr.mxu0 0.0
    %1483 = vmatpush1.msra.mxu0 0.0
    %1484 = vmatprep.subr.mxu0 0.0
    %1485 = vmatpush1.msra.mxu0 0.0
    %1486 = vmatprep.subr.mxu0 0.0
    %1487 = vmatpush1.msra.mxu0 0.0
    %1488 = vmatprep.subr.mxu0 0.0
    %1489 = vmatpush1.msra.mxu0 0.0
    %1490 = vmatprep.subr.mxu0 0.0
    %1491 = vmatpush1.msra.mxu0 0.0
    %1492 = vmatprep.subr.mxu0 0.0
    %1493 = vmatpush1.msra.mxu0 0.0
    %1494 = vmatprep.subr.mxu0 0.0
    %1495 = vmatpush1.msra.mxu0 0.0
    %1496 = vmatprep.subr.mxu0 0.0
    %1497 = vmatpush1.msra.mxu0 0.0
    %1498 = vmatprep.subr.mxu0 0.0
    %1499 = vmatpush1.msra.mxu0 0.0
    %1500 = vmatprep.subr.mxu0 0.0
    %1501 = vmatpush1.msra.mxu0 0.0
    %1502 = vmatprep.subr.mxu0 0.0
    %1503 = vmatpush1.msra.mxu0 0.0
    %1504 = vmatprep.subr.mxu0 0.0
    %1505 = vmatpush1.msra.mxu0 0.0
    %1506 = vmatprep.subr.mxu0 0.0
    %1507 = vmatpush1.msra.mxu0 0.0
    %1508 = vmatprep.subr.mxu0 0.0
    %1509 = vmatpush1.msra.mxu0 0.0
    %1510 = vmatprep.subr.mxu0 0.0
    %1511 = vmatpush1.msra.mxu0 0.0
    %1512 = vmatprep.subr.mxu0 0.0
    %1513 = vmatpush1.msra.mxu0 0.0
    %1514 = vmatprep.subr.mxu0 0.0
    %1515 = vmatpush1.msra.mxu0 0.0
    %1516 = vmatprep.subr.mxu0 0.0
    %1517 = vmatpush1.msra.mxu0 0.0
    %1518 = vmatprep.subr.mxu0 0.0
    %1519 = vmatpush1.msra.mxu0 0.0
    %1520 = vmatprep.subr.mxu0 0.0
    %1521 = vmatpush1.msra.mxu0 0.0
    %1522 = vmatprep.subr.mxu0 0.0
    %1523 = vmatpush1.msra.mxu0 0.0
    %1524 = vmatprep.subr.mxu0 0.0
    %1525 = vmatpush1.msra.mxu0 0.0
    %1526 = vmatprep.subr.mxu0 0.0
    %1527 = vmatpush1.msra.mxu0 0.0
    %1528 = vmatprep.subr.mxu0 0.0
    %1529 = vmatpush1.msra.mxu0 0.0
    %1530 = vmatprep.subr.mxu0 0.0
    %1531 = vmatpush1.msra.mxu0 0.0
    %1532 = vmatprep.subr.mxu0 0.0
    %1533 = vmatpush1.msra.mxu0 0.0
    %1534 = vmatprep.subr.mxu0 0.0
    %1535 = vmatpush1.msra.mxu0 0.0
    %1536 = vmatprep.subr.mxu0 0.0
    %1537 = vmatpush1.msra.mxu0 0.0
    %1538 = vmatprep.subr.mxu0 0.0
    %1539 = vmatpush1.msra.mxu0 0.0
    %1540 = vmatprep.mubr.f32.mxu0 0.0
    %1541 = vmatmul.mubr.f32.gmra.mrb[0].mxu0 %v1474
    %v1542 = vpop.f32.mrb[0].mxu0
    %v1543 = vadd.f32 0.0, %v1542
    %v1544 = vpop.f32.mrb[0].mxu0
    %1545 = vdwg.mxu0
    %1547 = vrot.lane.b32.xlu0 %v1543, 24
    %v1548 = vpop.permute.xlu0 %1547
    %vm1550 = vcmask 261312
    %1551 = vst.msk [vmem:[#allocation11] sm:$0xff] %vm1550, %v1548
    %v1552 = vsel %vm694, %v1453, -inf
    %1553 = vmax.xlane.f32.xlu0 %v1552
    %v1554 = vpop.xlane.xlu0 %1553
    %v1555 = vsub.f32 %v1453, %v1554
    %v1556 = vmul.f32 %v1555, 1.442695
    %v1557 = vpow.pop %v1556
    %1559 = vrot.lane.b32.xlu0 %v1557, 112
    %v1560 = vpop.permute.xlu0 %1559
    %v1562 = vsel %vm602, %v1560, 0.0
    %1563 = vadd.xlane.f32.xlu0 %v1562
    %v1564 = vpop.xlane.xlu0 %1563
    %v1565 = vrcp.pop %v1564
    %v1566 = vmul.f32 %v1557, %v1565
    %1568 = vrot.lane.b32.xlu0 %v1566, 112
    %v1569 = vpop.permute.xlu0 %1568
    %1570 = vrot.lane.b32.xlu0 %v508, 72
    %v1571 = vpop.permute.xlu0 %1570
    %1572 = vrot.lane.b32.xlu0 %v513, 72
    %v1573 = vpop.permute.xlu0 %1572
    %v1576 = vsel %vm602, %v1569, 0
    %1578 = vmatprep.subr.mxu0 0.0
    %1579 = vmatpush1.msra.mxu0 %v1571
    %1580 = vmatprep.subr.mxu0 0.0
    %1581 = vmatpush1.msra.mxu0 %v1573
    %1582 = vmatprep.subr.mxu0 0.0
    %1583 = vmatpush1.msra.mxu0 0.0
    %1584 = vmatprep.subr.mxu0 0.0
    %1585 = vmatpush1.msra.mxu0 0.0
    %1586 = vmatprep.subr.mxu0 0.0
    %1587 = vmatpush1.msra.mxu0 0.0
    %1588 = vmatprep.subr.mxu0 0.0
    %1589 = vmatpush1.msra.mxu0 0.0
    %1590 = vmatprep.subr.mxu0 0.0
    %1591 = vmatpush1.msra.mxu0 0.0
    %1592 = vmatprep.subr.mxu0 0.0
    %1593 = vmatpush1.msra.mxu0 0.0
    %1594 = vmatprep.subr.mxu0 0.0
    %1595 = vmatpush1.msra.mxu0 0.0
    %1596 = vmatprep.subr.mxu0 0.0
    %1597 = vmatpush1.msra.mxu0 0.0
    %1598 = vmatprep.subr.mxu0 0.0
    %1599 = vmatpush1.msra.mxu0 0.0
    %1600 = vmatprep.subr.mxu0 0.0
    %1601 = vmatpush1.msra.mxu0 0.0
    %1602 = vmatprep.subr.mxu0 0.0
    %1603 = vmatpush1.msra.mxu0 0.0
    %1604 = vmatprep.subr.mxu0 0.0
    %1605 = vmatpush1.msra.mxu0 0.0
    %1606 = vmatprep.subr.mxu0 0.0
    %1607 = vmatpush1.msra.mxu0 0.0
    %1608 = vmatprep.subr.mxu0 0.0
    %1609 = vmatpush1.msra.mxu0 0.0
    %1610 = vmatprep.subr.mxu0 0.0
    %1611 = vmatpush1.msra.mxu0 0.0
    %1612 = vmatprep.subr.mxu0 0.0
    %1613 = vmatpush1.msra.mxu0 0.0
    %1614 = vmatprep.subr.mxu0 0.0
    %1615 = vmatpush1.msra.mxu0 0.0
    %1616 = vmatprep.subr.mxu0 0.0
    %1617 = vmatpush1.msra.mxu0 0.0
    %1618 = vmatprep.subr.mxu0 0.0
    %1619 = vmatpush1.msra.mxu0 0.0
    %1620 = vmatprep.subr.mxu0 0.0
    %1621 = vmatpush1.msra.mxu0 0.0
    %1622 = vmatprep.subr.mxu0 0.0
    %1623 = vmatpush1.msra.mxu0 0.0
    %1624 = vmatprep.subr.mxu0 0.0
    %1625 = vmatpush1.msra.mxu0 0.0
    %1626 = vmatprep.subr.mxu0 0.0
    %1627 = vmatpush1.msra.mxu0 0.0
    %1628 = vmatprep.subr.mxu0 0.0
    %1629 = vmatpush1.msra.mxu0 0.0
    %1630 = vmatprep.subr.mxu0 0.0
    %1631 = vmatpush1.msra.mxu0 0.0
    %1632 = vmatprep.subr.mxu0 0.0
    %1633 = vmatpush1.msra.mxu0 0.0
    %1634 = vmatprep.subr.mxu0 0.0
    %1635 = vmatpush1.msra.mxu0 0.0
    %1636 = vmatprep.subr.mxu0 0.0
    %1637 = vmatpush1.msra.mxu0 0.0
    %1638 = vmatprep.subr.mxu0 0.0
    %1639 = vmatpush1.msra.mxu0 0.0
    %1640 = vmatprep.subr.mxu0 0.0
    %1641 = vmatpush1.msra.mxu0 0.0
    %1642 = vmatprep.mubr.f32.mxu0 0.0
    %1643 = vmatmul.mubr.f32.gmra.mrb[0].mxu0 %v1576
    %v1644 = vpop.f32.mrb[0].mxu0
    %v1645 = vadd.f32 0.0, %v1644
    %v1646 = vpop.f32.mrb[0].mxu0
    %1647 = vdwg.mxu0
    %1649 = vrot.lane.b32.xlu0 %v1645, 24
    %v1650 = vpop.permute.xlu0 %1649
    %1652 = vst.msk [vmem:[#allocation11 + $0x8] sm:$0xff] %vm1550, %v1650
    %v1653 = vld [vmem:[#allocation11] sm:$0xff]
    %v1654 = vld [vmem:[#allocation11 + $0x8] sm:$0xff]
    %v1655 = vld [vmem:[%s12] sm:$0xff]
    %v1656 = vld [vmem:[%s12 + $0x8] sm:$0xff]
    %v1657 = vld [vmem:[%s12 + $0x10] sm:$0xff]
    %v1658 = vld [vmem:[%s12 + $0x18] sm:$0xff]
    %v1659 = vld [vmem:[%s13] sm:$0x1]
    %v1661 = vlaneseq
    %v1662 = vshrl.u32 %v1661, 7
    %v1663 = vsub.s32 0, %v1662
    %v1664 = vrot.slane %v1659, %v1663
    %v1667 = vsel %vm216, %v1653, 0
    %v1670 = vsel %vm216, %v1654, 0
    %1672 = vmatprep.subr.mxu0 0.0
    %1673 = vmatpush1.msra.mxu0 %v1655
    %1674 = vmatprep.subr.mxu0 0.0
    %1675 = vmatpush1.msra.mxu0 %v1656
    %1676 = vmatprep.subr.mxu0 0.0
    %1677 = vmatpush1.msra.mxu0 %v1657
    %1678 = vmatprep.subr.mxu0 0.0
    %1679 = vmatpush1.msra.mxu0 %v1658
    %1680 = vmatprep.subr.mxu0 0.0
    %1681 = vmatpush1.msra.mxu0 0.0
    %1682 = vmatprep.subr.mxu0 0.0
    %1683 = vmatpush1.msra.mxu0 0.0
    %1684 = vmatprep.subr.mxu0 0.0
    %1685 = vmatpush1.msra.mxu0 0.0
    %1686 = vmatprep.subr.mxu0 0.0
    %1687 = vmatpush1.msra.mxu0 0.0
    %1688 = vmatprep.subr.mxu0 0.0
    %1689 = vmatpush1.msra.mxu0 0.0
    %1690 = vmatprep.subr.mxu0 0.0
    %1691 = vmatpush1.msra.mxu0 0.0
    %1692 = vmatprep.subr.mxu0 0.0
    %1693 = vmatpush1.msra.mxu0 0.0
    %1694 = vmatprep.subr.mxu0 0.0
    %1695 = vmatpush1.msra.mxu0 0.0
    %1696 = vmatprep.subr.mxu0 0.0
    %1697 = vmatpush1.msra.mxu0 0.0
    %1698 = vmatprep.subr.mxu0 0.0
    %1699 = vmatpush1.msra.mxu0 0.0
    %1700 = vmatprep.subr.mxu0 0.0
    %1701 = vmatpush1.msra.mxu0 0.0
    %1702 = vmatprep.subr.mxu0 0.0
    %1703 = vmatpush1.msra.mxu0 0.0
    %1704 = vmatprep.subr.mxu0 0.0
    %1705 = vmatpush1.msra.mxu0 0.0
    %1706 = vmatprep.subr.mxu0 0.0
    %1707 = vmatpush1.msra.mxu0 0.0
    %1708 = vmatprep.subr.mxu0 0.0
    %1709 = vmatpush1.msra.mxu0 0.0
    %1710 = vmatprep.subr.mxu0 0.0
    %1711 = vmatpush1.msra.mxu0 0.0
    %1712 = vmatprep.subr.mxu0 0.0
    %1713 = vmatpush1.msra.mxu0 0.0
    %1714 = vmatprep.subr.mxu0 0.0
    %1715 = vmatpush1.msra.mxu0 0.0
    %1716 = vmatprep.subr.mxu0 0.0
    %1717 = vmatpush1.msra.mxu0 0.0
    %1718 = vmatprep.subr.mxu0 0.0
    %1719 = vmatpush1.msra.mxu0 0.0
    %1720 = vmatprep.subr.mxu0 0.0
    %1721 = vmatpush1.msra.mxu0 0.0
    %1722 = vmatprep.subr.mxu0 0.0
    %1723 = vmatpush1.msra.mxu0 0.0
    %1724 = vmatprep.subr.mxu0 0.0
    %1725 = vmatpush1.msra.mxu0 0.0
    %1726 = vmatprep.subr.mxu0 0.0
    %1727 = vmatpush1.msra.mxu0 0.0
    %1728 = vmatprep.subr.mxu0 0.0
    %1729 = vmatpush1.msra.mxu0 0.0
    %1730 = vmatprep.subr.mxu0 0.0
    %1731 = vmatpush1.msra.mxu0 0.0
    %1732 = vmatprep.subr.mxu0 0.0
    %1733 = vmatpush1.msra.mxu0 0.0
    %1734 = vmatprep.subr.mxu0 0.0
    %1735 = vmatpush1.msra.mxu0 0.0
    %1736 = vmatprep.mubr.f32.mxu0 0.0
    %1737 = vmatmul.mubr.f32.gmra.mrb[0].mxu0 %v1667
    %v1738 = vpop.f32.mrb[0].mxu0
    %v1739 = vadd.f32 %v1664, %v1738
    %v1740 = vpop.f32.mrb[0].mxu0
    %1741 = vmatprep.mubr.f32.mxu0 0.0
    %1742 = vmatmul.mubr.f32.gmra.mrb[0].mxu0 %v1670
    %v1743 = vpop.f32.mrb[0].mxu0
    %v1744 = vadd.f32 %v1664, %v1743
    %v1745 = vpop.f32.mrb[0].mxu0
    %1746 = vdwg.mxu0
    %1747 = vst.msk [vmem:[#allocation11] sm:$0xff] %vm216, %v1739
    %1748 = vst.msk [vmem:[#allocation11 + $0x8] sm:$0xff] %vm216, %v1744
    // Predicated region
    $region78: #{tpu_custom_call.1} parent=1 // pred_check
      _
    $region79: #{tpu_custom_call.1} parent=1 // pred_check_branch
      %1750 = sbr.rel (0) target = $region81
    $region80: #{tpu_custom_call.1} parent=1 // pred_region
      %s1752 = ssub.s32 256, 256
      %1753 = vsyncadd [#allocation4], %s1752
      %s1754 = sshll.u32 [#allocation11], 4
      %s1755 = int_to_ptr.vmem [resolvable:$true] %s1754
      %1760 = dma.vmem_to_hbm [thread:$0]  %s1755, 256, %s14, [#allocation4], 128, 128, 8
    $region81: #{tpu_custom_call.1} parent=1 // pred_fallthru
      _
    // Predicated region
    $region82: #{tpu_custom_call.1} parent=1 // pred_check
      _
    $region83: #{tpu_custom_call.1} parent=1 // pred_check_branch
      %1762 = sbr.rel (0) target = $region85
    $region84: #{tpu_custom_call.1} parent=1 // pred_region
      %1763 = dma.done [#allocation4], 256
    $region85: #{tpu_custom_call.1} parent=1 // pred_fallthru
      _
    %1764 = vsyncpa [#allocation3], 1
    %1765 = vsyncpa [#allocation6], 1
    %1766 = vsyncpa [#allocation9], 1
    %1767 = vsyncpa [#allocation4], 1

</llo_original>
